<compile_context>
chip_gen: v6e
topology: v6e:2x2x1
jax: 0.10.0
libtpu: 0.0.40
codegen_flags: <defaults>
</compile_context>

<pallas_src>
import functools

import jax
import jax.numpy as jnp
from jax.experimental import pallas as pl
from jax.experimental.pallas import tpu as pltpu

_LANE = 128   # lanes per batch tile
_SUB = 8      # sublanes per batch tile (one f32 vreg per feature map)
_IN, _H1, _H2, _OUT = 4, 10, 10, 3
_MIN_BLOCKS = 4   # target grid blocks (v7x megacore sharding + pipelining)

# Row offsets inside the lane-replicated weight table (one row per scalar).
_W1_OFF = 0                       # w1[j, k] at j*4  + k   (40 rows)
_B1_OFF = _W1_OFF + _H1 * _IN     # b1[j]                  (10 rows)
_W2_OFF = _B1_OFF + _H1           # w2[j, k] at j*10 + k   (100 rows)
_B2_OFF = _W2_OFF + _H2 * _H1     # b2[j]                  (10 rows)
_W3_OFF = _B2_OFF + _H2           # w3[j, k] at j*10 + k   (30 rows)
_B3_OFF = _W3_OFF + _OUT * _H2    # b3[j]                  (3 rows)
_N_W = _B3_OFF + _OUT             # 193 scalars total
def _round_up(n, m):
    return ((n + m - 1) // m) * m
_W_ROWS = _round_up(_N_W, _SUB)   # 200 (keeps the table tile-aligned)


def _mlp_kernel(w_ref, x_ref, o_ref, *, n_chunks):
    # w_ref: (_W_ROWS, 8, 128) VMEM — row r is scalar r replicated over an (8,128) tile.
    # x_ref: (4, sub_block, 128) VMEM   o_ref: (3, sub_block, 128) VMEM
    # Batch is packed on (sublane, lane); features on the leading (cheap) axis.

    def wv(r):                 # broadcast weight tile: one vld, zero VALU splats
        return w_ref[r, :, :]

    @pl.loop(0, n_chunks)
    def _(c):
        s = pl.multiple_of(c * _SUB, _SUB)

        # Input feature maps for this (8, 128) batch tile — 4 dense vregs.
        xk = [x_ref[k, pl.ds(s, _SUB), :] for k in range(_IN)]

        # fc1 + ReLU: VPU multiply-add chains (K=4), weights fetched on the vld slot.
        h1 = []
        for j in range(_H1):
            acc = xk[0] * wv(_W1_OFF + j * _IN)
            for k in range(1, _IN):
                acc = acc + xk[k] * wv(_W1_OFF + j * _IN + k)
            h1.append(jnp.maximum(acc + wv(_B1_OFF + j), 0.0))

        # fc2 + ReLU (K=10).
        h2 = []
        for j in range(_H2):
            acc = h1[0] * wv(_W2_OFF + j * _H1)
            for k in range(1, _H1):
                acc = acc + h1[k] * wv(_W2_OFF + j * _H1 + k)
            h2.append(jnp.maximum(acc + wv(_B2_OFF + j), 0.0))

        # fc3 logits (K=10).
        z = []
        for j in range(_OUT):
            acc = h2[0] * wv(_W3_OFF + j * _H2)
            for k in range(1, _H2):
                acc = acc + h2[k] * wv(_W3_OFF + j * _H2 + k)
            z.append(acc + wv(_B3_OFF + j))

        # log_softmax over the 3 classes: elementwise max/sum (VPU) + exp/log (EUP),
        # no cross-lane reduction needed.
        m = jnp.maximum(z[0], jnp.maximum(z[1], z[2]))
        e0 = jnp.exp(z[0] - m)
        e1 = jnp.exp(z[1] - m)
        e2 = jnp.exp(z[2] - m)
        lse = m + jnp.log(e0 + e1 + e2)

        # Lane-dense, unmasked stores (full 128-lane rows).
        for j in range(_OUT):
            o_ref[j, pl.ds(s, _SUB), :] = z[j] - lse


def pack_params(params):
    """Flatten weights/biases and lane-replicate into a (_W_ROWS, 8, 128) f32 table."""
    flat = jnp.concatenate([
        params["w1"].reshape(-1), params["b1"],
        params["w2"].reshape(-1), params["b2"],
        params["w3"].reshape(-1), params["b3"],
    ]).astype(jnp.float32)
    flat = jnp.pad(flat, (0, _W_ROWS - _N_W))
    return jnp.broadcast_to(flat[:, None, None], (_W_ROWS, _SUB, _LANE))


def _choose_sub_block(rows, block_rows):
    # >= _MIN_BLOCKS grid blocks whenever rows permit; multiple of 8 sublanes.
    target = _round_up(max(pl.cdiv(rows, _MIN_BLOCKS), 1), _SUB)
    return max(_SUB, min(block_rows, target))


def net_forward_packed(xt, w_table, *, block_rows=1024):
    """Lane-dense entry point: xt is (4, rows, 128) f32, returns (3, rows, 128).

    Large-batch callers should keep activations in this layout end-to-end to avoid
    the pad/transpose HBM round trips done by `net_forward`.
    """
    rows = xt.shape[1]
    sub_block = _choose_sub_block(rows, block_rows)
    rows_pad = _round_up(rows, sub_block)
    xt = jnp.pad(xt, ((0, 0), (0, rows_pad - rows), (0, 0)))
    n_blocks = rows_pad // sub_block

    kernel = functools.partial(_mlp_kernel, n_chunks=sub_block // _SUB)

    ot = pl.pallas_call(
        kernel,
        out_shape=jax.ShapeDtypeStruct((_OUT, rows_pad, _LANE), jnp.float32),
        grid=(n_blocks,),
        in_specs=[
            # Weight table: constant block index -> DMA'd into VMEM once, stays resident.
            pl.BlockSpec((_W_ROWS, _SUB, _LANE), lambda i: (0, 0, 0)),
            pl.BlockSpec((_IN, sub_block, _LANE), lambda i: (0, i, 0)),
        ],
        out_specs=pl.BlockSpec((_OUT, sub_block, _LANE), lambda i: (0, i, 0)),
        compiler_params=pltpu.CompilerParams(
            dimension_semantics=("parallel",),   # batch axis shards across v7x's 2 TCs
        ),
    )(w_table, xt)

    return ot[:, :rows, :]


def net_forward(x, params, *, block_rows=1024):
    """x: (B, 4) float32 -> (B, 3) float32 log-probabilities."""
    B = x.shape[0]
    x = x.astype(jnp.float32)

    # Layout plumbing for the standard (B, 4) API: pad batch to a multiple of 128
    # lanes and transpose once so batch is the fast (lane) axis in the kernel.
    # For large batches prefer net_forward_packed and keep this layout upstream.
    rows = max(pl.cdiv(B, _LANE), 1)
    b_pad = rows * _LANE
    x_pad = jnp.pad(x, ((0, b_pad - B), (0, 0)))
    xt = x_pad.T.reshape(_IN, rows, _LANE)

    ot = net_forward_packed(xt, pack_params(params), block_rows=block_rows)

    # Back to (B, 3) outside the kernel.
    return ot.reshape(_OUT, b_pad).T[:B]


def init_params(key):
    """Deterministic init mimicking nn.Linear's U(-1/sqrt(fan_in), 1/sqrt(fan_in)).

    Weights stored PyTorch-style as (out_features, in_features); biases as (out,).
    """
    def linear(key, fan_in, fan_out):
        kw, kb = jax.random.split(key)
        bound = 1.0 / jnp.sqrt(fan_in)
        w = jax.random.uniform(kw, (fan_out, fan_in), jnp.float32, -bound, bound)
        b = jax.random.uniform(kb, (fan_out,), jnp.float32, -bound, bound)
        return w, b

    k1, k2, k3 = jax.random.split(key, 3)
    w1, b1 = linear(k1, 4, 10)
    w2, b2 = linear(k2, 10, 10)
    w3, b3 = linear(k3, 10, 3)
    return {"w1": w1, "b1": b1, "w2": w2, "b2": b2, "w3": w3, "b3": b3}


def _reference(x, p):
    h1 = jnp.maximum(x @ p["w1"].T + p["b1"], 0.0)
    h2 = jnp.maximum(h1 @ p["w2"].T + p["b2"], 0.0)
    z = h2 @ p["w3"].T + p["b3"]
    return jax.nn.log_softmax(z, axis=1)


if __name__ == "__main__":
    key = jax.random.PRNGKey(0)
    kx, kp = jax.random.split(key)

    B = 8
    x = jax.random.normal(kx, (B, 4), dtype=jnp.float32)
    params = init_params(kp)

    out = jax.jit(net_forward)(x, params)
    out = jax.block_until_ready(out)

    ref = _reference(x, params)
    assert out.shape == (B, 3)
    assert jnp.allclose(out, ref, atol=2e-5, rtol=1e-5), (
        float(jnp.max(jnp.abs(out - ref))))

    print("KERNEL_OK")
</pallas_src>

<mosaic_0001>
module attributes {stable_mosaic.version = 11 : i64} {
  func.func @_mlp_kernel(%arg0: i32, %arg1: memref<200x8x128xf32, #tpu.memory_space<vmem>>, %arg2: memref<4x8x128xf32, #tpu.memory_space<vmem>>, %arg3: memref<3x8x128xf32, #tpu.memory_space<vmem>>) attributes {dimension_semantics = [#tpu.dimension_semantics<parallel>], iteration_bounds = array<i64: 1>, scalar_prefetch = 0 : i64, scratch_operands = 0 : i64, tpu.core_type = #tpu.core_type<tc>, window_params = [{pipeline_mode = #tpu.pipeline_mode<synchronous>, transform_indices = @transform_0, window_bounds = array<i64: 200, 8, 128>}, {transform_indices = @transform_1, window_bounds = array<i64: 4, 8, 128>}, {transform_indices = @transform_2, window_bounds = array<i64: 3, 8, 128>}]} {
    %c0_i32 = arith.constant 0 : i32
    %c1_i32 = arith.constant 1 : i32
    %0 = arith.muli %c0_i32, %c1_i32 : i32
    %c0_i32_0 = arith.constant 0 : i32
    %1 = arith.addi %c0_i32_0, %0 : i32
    %c8_i32 = arith.constant 8 : i32
    %2 = arith.muli %1, %c8_i32 : i32
    %3 = tpu.assume_multiple %2, 8 : i32
    %c0 = arith.constant 0 : index
    %4 = arith.index_cast %3 : i32 to index
    %c0_1 = arith.constant 0 : index
    %5 = vector.load %arg2[%c0, %4, %c0_1] : memref<4x8x128xf32, #tpu.memory_space<vmem>>, vector<1x8x128xf32>
    %6 = vector.shape_cast %5 : vector<1x8x128xf32> to vector<8x128xf32>
    %c1 = arith.constant 1 : index
    %7 = arith.index_cast %3 : i32 to index
    %c0_2 = arith.constant 0 : index
    %8 = vector.load %arg2[%c1, %7, %c0_2] : memref<4x8x128xf32, #tpu.memory_space<vmem>>, vector<1x8x128xf32>
    %9 = vector.shape_cast %8 : vector<1x8x128xf32> to vector<8x128xf32>
    %c2 = arith.constant 2 : index
    %10 = arith.index_cast %3 : i32 to index
    %c0_3 = arith.constant 0 : index
    %11 = vector.load %arg2[%c2, %10, %c0_3] : memref<4x8x128xf32, #tpu.memory_space<vmem>>, vector<1x8x128xf32>
    %12 = vector.shape_cast %11 : vector<1x8x128xf32> to vector<8x128xf32>
    %c3 = arith.constant 3 : index
    %13 = arith.index_cast %3 : i32 to index
    %c0_4 = arith.constant 0 : index
    %14 = vector.load %arg2[%c3, %13, %c0_4] : memref<4x8x128xf32, #tpu.memory_space<vmem>>, vector<1x8x128xf32>
    %15 = vector.shape_cast %14 : vector<1x8x128xf32> to vector<8x128xf32>
    %c0_5 = arith.constant 0 : index
    %c0_6 = arith.constant 0 : index
    %c0_7 = arith.constant 0 : index
    %16 = vector.load %arg1[%c0_5, %c0_6, %c0_7] : memref<200x8x128xf32, #tpu.memory_space<vmem>>, vector<1x8x128xf32>
    %17 = vector.shape_cast %16 : vector<1x8x128xf32> to vector<8x128xf32>
    %18 = arith.mulf %6, %17 : vector<8x128xf32>
    %c1_8 = arith.constant 1 : index
    %c0_9 = arith.constant 0 : index
    %c0_10 = arith.constant 0 : index
    %19 = vector.load %arg1[%c1_8, %c0_9, %c0_10] : memref<200x8x128xf32, #tpu.memory_space<vmem>>, vector<1x8x128xf32>
    %20 = vector.shape_cast %19 : vector<1x8x128xf32> to vector<8x128xf32>
    %21 = arith.mulf %9, %20 : vector<8x128xf32>
    %22 = arith.addf %18, %21 : vector<8x128xf32>
    %c2_11 = arith.constant 2 : index
    %c0_12 = arith.constant 0 : index
    %c0_13 = arith.constant 0 : index
    %23 = vector.load %arg1[%c2_11, %c0_12, %c0_13] : memref<200x8x128xf32, #tpu.memory_space<vmem>>, vector<1x8x128xf32>
    %24 = vector.shape_cast %23 : vector<1x8x128xf32> to vector<8x128xf32>
    %25 = arith.mulf %12, %24 : vector<8x128xf32>
    %26 = arith.addf %22, %25 : vector<8x128xf32>
    %c3_14 = arith.constant 3 : index
    %c0_15 = arith.constant 0 : index
    %c0_16 = arith.constant 0 : index
    %27 = vector.load %arg1[%c3_14, %c0_15, %c0_16] : memref<200x8x128xf32, #tpu.memory_space<vmem>>, vector<1x8x128xf32>
    %28 = vector.shape_cast %27 : vector<1x8x128xf32> to vector<8x128xf32>
    %29 = arith.mulf %15, %28 : vector<8x128xf32>
    %30 = arith.addf %26, %29 : vector<8x128xf32>
    %c40 = arith.constant 40 : index
    %c0_17 = arith.constant 0 : index
    %c0_18 = arith.constant 0 : index
    %31 = vector.load %arg1[%c40, %c0_17, %c0_18] : memref<200x8x128xf32, #tpu.memory_space<vmem>>, vector<1x8x128xf32>
    %32 = vector.shape_cast %31 : vector<1x8x128xf32> to vector<8x128xf32>
    %33 = arith.addf %30, %32 : vector<8x128xf32>
    %cst = arith.constant 0.000000e+00 : f32
    %34 = vector.broadcast %cst : f32 to vector<8x128xf32>
    %35 = arith.maximumf %33, %34 : vector<8x128xf32>
    %c4 = arith.constant 4 : index
    %c0_19 = arith.constant 0 : index
    %c0_20 = arith.constant 0 : index
    %36 = vector.load %arg1[%c4, %c0_19, %c0_20] : memref<200x8x128xf32, #tpu.memory_space<vmem>>, vector<1x8x128xf32>
    %37 = vector.shape_cast %36 : vector<1x8x128xf32> to vector<8x128xf32>
    %38 = arith.mulf %6, %37 : vector<8x128xf32>
    %c5 = arith.constant 5 : index
    %c0_21 = arith.constant 0 : index
    %c0_22 = arith.constant 0 : index
    %39 = vector.load %arg1[%c5, %c0_21, %c0_22] : memref<200x8x128xf32, #tpu.memory_space<vmem>>, vector<1x8x128xf32>
    %40 = vector.shape_cast %39 : vector<1x8x128xf32> to vector<8x128xf32>
    %41 = arith.mulf %9, %40 : vector<8x128xf32>
    %42 = arith.addf %38, %41 : vector<8x128xf32>
    %c6 = arith.constant 6 : index
    %c0_23 = arith.constant 0 : index
    %c0_24 = arith.constant 0 : index
    %43 = vector.load %arg1[%c6, %c0_23, %c0_24] : memref<200x8x128xf32, #tpu.memory_space<vmem>>, vector<1x8x128xf32>
    %44 = vector.shape_cast %43 : vector<1x8x128xf32> to vector<8x128xf32>
    %45 = arith.mulf %12, %44 : vector<8x128xf32>
    %46 = arith.addf %42, %45 : vector<8x128xf32>
    %c7 = arith.constant 7 : index
    %c0_25 = arith.constant 0 : index
    %c0_26 = arith.constant 0 : index
    %47 = vector.load %arg1[%c7, %c0_25, %c0_26] : memref<200x8x128xf32, #tpu.memory_space<vmem>>, vector<1x8x128xf32>
    %48 = vector.shape_cast %47 : vector<1x8x128xf32> to vector<8x128xf32>
    %49 = arith.mulf %15, %48 : vector<8x128xf32>
    %50 = arith.addf %46, %49 : vector<8x128xf32>
    %c41 = arith.constant 41 : index
    %c0_27 = arith.constant 0 : index
    %c0_28 = arith.constant 0 : index
    %51 = vector.load %arg1[%c41, %c0_27, %c0_28] : memref<200x8x128xf32, #tpu.memory_space<vmem>>, vector<1x8x128xf32>
    %52 = vector.shape_cast %51 : vector<1x8x128xf32> to vector<8x128xf32>
    %53 = arith.addf %50, %52 : vector<8x128xf32>
    %cst_29 = arith.constant 0.000000e+00 : f32
    %54 = vector.broadcast %cst_29 : f32 to vector<8x128xf32>
    %55 = arith.maximumf %53, %54 : vector<8x128xf32>
    %c8 = arith.constant 8 : index
    %c0_30 = arith.constant 0 : index
    %c0_31 = arith.constant 0 : index
    %56 = vector.load %arg1[%c8, %c0_30, %c0_31] : memref<200x8x128xf32, #tpu.memory_space<vmem>>, vector<1x8x128xf32>
    %57 = vector.shape_cast %56 : vector<1x8x128xf32> to vector<8x128xf32>
    %58 = arith.mulf %6, %57 : vector<8x128xf32>
    %c9 = arith.constant 9 : index
    %c0_32 = arith.constant 0 : index
    %c0_33 = arith.constant 0 : index
    %59 = vector.load %arg1[%c9, %c0_32, %c0_33] : memref<200x8x128xf32, #tpu.memory_space<vmem>>, vector<1x8x128xf32>
    %60 = vector.shape_cast %59 : vector<1x8x128xf32> to vector<8x128xf32>
    %61 = arith.mulf %9, %60 : vector<8x128xf32>
    %62 = arith.addf %58, %61 : vector<8x128xf32>
    %c10 = arith.constant 10 : index
    %c0_34 = arith.constant 0 : index
    %c0_35 = arith.constant 0 : index
    %63 = vector.load %arg1[%c10, %c0_34, %c0_35] : memref<200x8x128xf32, #tpu.memory_space<vmem>>, vector<1x8x128xf32>
    %64 = vector.shape_cast %63 : vector<1x8x128xf32> to vector<8x128xf32>
    %65 = arith.mulf %12, %64 : vector<8x128xf32>
    %66 = arith.addf %62, %65 : vector<8x128xf32>
    %c11 = arith.constant 11 : index
    %c0_36 = arith.constant 0 : index
    %c0_37 = arith.constant 0 : index
    %67 = vector.load %arg1[%c11, %c0_36, %c0_37] : memref<200x8x128xf32, #tpu.memory_space<vmem>>, vector<1x8x128xf32>
    %68 = vector.shape_cast %67 : vector<1x8x128xf32> to vector<8x128xf32>
    %69 = arith.mulf %15, %68 : vector<8x128xf32>
    %70 = arith.addf %66, %69 : vector<8x128xf32>
    %c42 = arith.constant 42 : index
    %c0_38 = arith.constant 0 : index
    %c0_39 = arith.constant 0 : index
    %71 = vector.load %arg1[%c42, %c0_38, %c0_39] : memref<200x8x128xf32, #tpu.memory_space<vmem>>, vector<1x8x128xf32>
    %72 = vector.shape_cast %71 : vector<1x8x128xf32> to vector<8x128xf32>
    %73 = arith.addf %70, %72 : vector<8x128xf32>
    %cst_40 = arith.constant 0.000000e+00 : f32
    %74 = vector.broadcast %cst_40 : f32 to vector<8x128xf32>
    %75 = arith.maximumf %73, %74 : vector<8x128xf32>
    %c12 = arith.constant 12 : index
    %c0_41 = arith.constant 0 : index
    %c0_42 = arith.constant 0 : index
    %76 = vector.load %arg1[%c12, %c0_41, %c0_42] : memref<200x8x128xf32, #tpu.memory_space<vmem>>, vector<1x8x128xf32>
    %77 = vector.shape_cast %76 : vector<1x8x128xf32> to vector<8x128xf32>
    %78 = arith.mulf %6, %77 : vector<8x128xf32>
    %c13 = arith.constant 13 : index
    %c0_43 = arith.constant 0 : index
    %c0_44 = arith.constant 0 : index
    %79 = vector.load %arg1[%c13, %c0_43, %c0_44] : memref<200x8x128xf32, #tpu.memory_space<vmem>>, vector<1x8x128xf32>
    %80 = vector.shape_cast %79 : vector<1x8x128xf32> to vector<8x128xf32>
    %81 = arith.mulf %9, %80 : vector<8x128xf32>
    %82 = arith.addf %78, %81 : vector<8x128xf32>
    %c14 = arith.constant 14 : index
    %c0_45 = arith.constant 0 : index
    %c0_46 = arith.constant 0 : index
    %83 = vector.load %arg1[%c14, %c0_45, %c0_46] : memref<200x8x128xf32, #tpu.memory_space<vmem>>, vector<1x8x128xf32>
    %84 = vector.shape_cast %83 : vector<1x8x128xf32> to vector<8x128xf32>
    %85 = arith.mulf %12, %84 : vector<8x128xf32>
    %86 = arith.addf %82, %85 : vector<8x128xf32>
    %c15 = arith.constant 15 : index
    %c0_47 = arith.constant 0 : index
    %c0_48 = arith.constant 0 : index
    %87 = vector.load %arg1[%c15, %c0_47, %c0_48] : memref<200x8x128xf32, #tpu.memory_space<vmem>>, vector<1x8x128xf32>
    %88 = vector.shape_cast %87 : vector<1x8x128xf32> to vector<8x128xf32>
    %89 = arith.mulf %15, %88 : vector<8x128xf32>
    %90 = arith.addf %86, %89 : vector<8x128xf32>
    %c43 = arith.constant 43 : index
    %c0_49 = arith.constant 0 : index
    %c0_50 = arith.constant 0 : index
    %91 = vector.load %arg1[%c43, %c0_49, %c0_50] : memref<200x8x128xf32, #tpu.memory_space<vmem>>, vector<1x8x128xf32>
    %92 = vector.shape_cast %91 : vector<1x8x128xf32> to vector<8x128xf32>
    %93 = arith.addf %90, %92 : vector<8x128xf32>
    %cst_51 = arith.constant 0.000000e+00 : f32
    %94 = vector.broadcast %cst_51 : f32 to vector<8x128xf32>
    %95 = arith.maximumf %93, %94 : vector<8x128xf32>
    %c16 = arith.constant 16 : index
    %c0_52 = arith.constant 0 : index
    %c0_53 = arith.constant 0 : index
    %96 = vector.load %arg1[%c16, %c0_52, %c0_53] : memref<200x8x128xf32, #tpu.memory_space<vmem>>, vector<1x8x128xf32>
    %97 = vector.shape_cast %96 : vector<1x8x128xf32> to vector<8x128xf32>
    %98 = arith.mulf %6, %97 : vector<8x128xf32>
    %c17 = arith.constant 17 : index
    %c0_54 = arith.constant 0 : index
    %c0_55 = arith.constant 0 : index
    %99 = vector.load %arg1[%c17, %c0_54, %c0_55] : memref<200x8x128xf32, #tpu.memory_space<vmem>>, vector<1x8x128xf32>
    %100 = vector.shape_cast %99 : vector<1x8x128xf32> to vector<8x128xf32>
    %101 = arith.mulf %9, %100 : vector<8x128xf32>
    %102 = arith.addf %98, %101 : vector<8x128xf32>
    %c18 = arith.constant 18 : index
    %c0_56 = arith.constant 0 : index
    %c0_57 = arith.constant 0 : index
    %103 = vector.load %arg1[%c18, %c0_56, %c0_57] : memref<200x8x128xf32, #tpu.memory_space<vmem>>, vector<1x8x128xf32>
    %104 = vector.shape_cast %103 : vector<1x8x128xf32> to vector<8x128xf32>
    %105 = arith.mulf %12, %104 : vector<8x128xf32>
    %106 = arith.addf %102, %105 : vector<8x128xf32>
    %c19 = arith.constant 19 : index
    %c0_58 = arith.constant 0 : index
    %c0_59 = arith.constant 0 : index
    %107 = vector.load %arg1[%c19, %c0_58, %c0_59] : memref<200x8x128xf32, #tpu.memory_space<vmem>>, vector<1x8x128xf32>
    %108 = vector.shape_cast %107 : vector<1x8x128xf32> to vector<8x128xf32>
    %109 = arith.mulf %15, %108 : vector<8x128xf32>
    %110 = arith.addf %106, %109 : vector<8x128xf32>
    %c44 = arith.constant 44 : index
    %c0_60 = arith.constant 0 : index
    %c0_61 = arith.constant 0 : index
    %111 = vector.load %arg1[%c44, %c0_60, %c0_61] : memref<200x8x128xf32, #tpu.memory_space<vmem>>, vector<1x8x128xf32>
    %112 = vector.shape_cast %111 : vector<1x8x128xf32> to vector<8x128xf32>
    %113 = arith.addf %110, %112 : vector<8x128xf32>
    %cst_62 = arith.constant 0.000000e+00 : f32
    %114 = vector.broadcast %cst_62 : f32 to vector<8x128xf32>
    %115 = arith.maximumf %113, %114 : vector<8x128xf32>
    %c20 = arith.constant 20 : index
    %c0_63 = arith.constant 0 : index
    %c0_64 = arith.constant 0 : index
    %116 = vector.load %arg1[%c20, %c0_63, %c0_64] : memref<200x8x128xf32, #tpu.memory_space<vmem>>, vector<1x8x128xf32>
    %117 = vector.shape_cast %116 : vector<1x8x128xf32> to vector<8x128xf32>
    %118 = arith.mulf %6, %117 : vector<8x128xf32>
    %c21 = arith.constant 21 : index
    %c0_65 = arith.constant 0 : index
    %c0_66 = arith.constant 0 : index
    %119 = vector.load %arg1[%c21, %c0_65, %c0_66] : memref<200x8x128xf32, #tpu.memory_space<vmem>>, vector<1x8x128xf32>
    %120 = vector.shape_cast %119 : vector<1x8x128xf32> to vector<8x128xf32>
    %121 = arith.mulf %9, %120 : vector<8x128xf32>
    %122 = arith.addf %118, %121 : vector<8x128xf32>
    %c22 = arith.constant 22 : index
    %c0_67 = arith.constant 0 : index
    %c0_68 = arith.constant 0 : index
    %123 = vector.load %arg1[%c22, %c0_67, %c0_68] : memref<200x8x128xf32, #tpu.memory_space<vmem>>, vector<1x8x128xf32>
    %124 = vector.shape_cast %123 : vector<1x8x128xf32> to vector<8x128xf32>
    %125 = arith.mulf %12, %124 : vector<8x128xf32>
    %126 = arith.addf %122, %125 : vector<8x128xf32>
    %c23 = arith.constant 23 : index
    %c0_69 = arith.constant 0 : index
    %c0_70 = arith.constant 0 : index
    %127 = vector.load %arg1[%c23, %c0_69, %c0_70] : memref<200x8x128xf32, #tpu.memory_space<vmem>>, vector<1x8x128xf32>
    %128 = vector.shape_cast %127 : vector<1x8x128xf32> to vector<8x128xf32>
    %129 = arith.mulf %15, %128 : vector<8x128xf32>
    %130 = arith.addf %126, %129 : vector<8x128xf32>
    %c45 = arith.constant 45 : index
    %c0_71 = arith.constant 0 : index
    %c0_72 = arith.constant 0 : index
    %131 = vector.load %arg1[%c45, %c0_71, %c0_72] : memref<200x8x128xf32, #tpu.memory_space<vmem>>, vector<1x8x128xf32>
    %132 = vector.shape_cast %131 : vector<1x8x128xf32> to vector<8x128xf32>
    %133 = arith.addf %130, %132 : vector<8x128xf32>
    %cst_73 = arith.constant 0.000000e+00 : f32
    %134 = vector.broadcast %cst_73 : f32 to vector<8x128xf32>
    %135 = arith.maximumf %133, %134 : vector<8x128xf32>
    %c24 = arith.constant 24 : index
    %c0_74 = arith.constant 0 : index
    %c0_75 = arith.constant 0 : index
    %136 = vector.load %arg1[%c24, %c0_74, %c0_75] : memref<200x8x128xf32, #tpu.memory_space<vmem>>, vector<1x8x128xf32>
    %137 = vector.shape_cast %136 : vector<1x8x128xf32> to vector<8x128xf32>
    %138 = arith.mulf %6, %137 : vector<8x128xf32>
    %c25 = arith.constant 25 : index
    %c0_76 = arith.constant 0 : index
    %c0_77 = arith.constant 0 : index
    %139 = vector.load %arg1[%c25, %c0_76, %c0_77] : memref<200x8x128xf32, #tpu.memory_space<vmem>>, vector<1x8x128xf32>
    %140 = vector.shape_cast %139 : vector<1x8x128xf32> to vector<8x128xf32>
    %141 = arith.mulf %9, %140 : vector<8x128xf32>
    %142 = arith.addf %138, %141 : vector<8x128xf32>
    %c26 = arith.constant 26 : index
    %c0_78 = arith.constant 0 : index
    %c0_79 = arith.constant 0 : index
    %143 = vector.load %arg1[%c26, %c0_78, %c0_79] : memref<200x8x128xf32, #tpu.memory_space<vmem>>, vector<1x8x128xf32>
    %144 = vector.shape_cast %143 : vector<1x8x128xf32> to vector<8x128xf32>
    %145 = arith.mulf %12, %144 : vector<8x128xf32>
    %146 = arith.addf %142, %145 : vector<8x128xf32>
    %c27 = arith.constant 27 : index
    %c0_80 = arith.constant 0 : index
    %c0_81 = arith.constant 0 : index
    %147 = vector.load %arg1[%c27, %c0_80, %c0_81] : memref<200x8x128xf32, #tpu.memory_space<vmem>>, vector<1x8x128xf32>
    %148 = vector.shape_cast %147 : vector<1x8x128xf32> to vector<8x128xf32>
    %149 = arith.mulf %15, %148 : vector<8x128xf32>
    %150 = arith.addf %146, %149 : vector<8x128xf32>
    %c46 = arith.constant 46 : index
    %c0_82 = arith.constant 0 : index
    %c0_83 = arith.constant 0 : index
    %151 = vector.load %arg1[%c46, %c0_82, %c0_83] : memref<200x8x128xf32, #tpu.memory_space<vmem>>, vector<1x8x128xf32>
    %152 = vector.shape_cast %151 : vector<1x8x128xf32> to vector<8x128xf32>
    %153 = arith.addf %150, %152 : vector<8x128xf32>
    %cst_84 = arith.constant 0.000000e+00 : f32
    %154 = vector.broadcast %cst_84 : f32 to vector<8x128xf32>
    %155 = arith.maximumf %153, %154 : vector<8x128xf32>
    %c28 = arith.constant 28 : index
    %c0_85 = arith.constant 0 : index
    %c0_86 = arith.constant 0 : index
    %156 = vector.load %arg1[%c28, %c0_85, %c0_86] : memref<200x8x128xf32, #tpu.memory_space<vmem>>, vector<1x8x128xf32>
    %157 = vector.shape_cast %156 : vector<1x8x128xf32> to vector<8x128xf32>
    %158 = arith.mulf %6, %157 : vector<8x128xf32>
    %c29 = arith.constant 29 : index
    %c0_87 = arith.constant 0 : index
    %c0_88 = arith.constant 0 : index
    %159 = vector.load %arg1[%c29, %c0_87, %c0_88] : memref<200x8x128xf32, #tpu.memory_space<vmem>>, vector<1x8x128xf32>
    %160 = vector.shape_cast %159 : vector<1x8x128xf32> to vector<8x128xf32>
    %161 = arith.mulf %9, %160 : vector<8x128xf32>
    %162 = arith.addf %158, %161 : vector<8x128xf32>
    %c30 = arith.constant 30 : index
    %c0_89 = arith.constant 0 : index
    %c0_90 = arith.constant 0 : index
    %163 = vector.load %arg1[%c30, %c0_89, %c0_90] : memref<200x8x128xf32, #tpu.memory_space<vmem>>, vector<1x8x128xf32>
    %164 = vector.shape_cast %163 : vector<1x8x128xf32> to vector<8x128xf32>
    %165 = arith.mulf %12, %164 : vector<8x128xf32>
    %166 = arith.addf %162, %165 : vector<8x128xf32>
    %c31 = arith.constant 31 : index
    %c0_91 = arith.constant 0 : index
    %c0_92 = arith.constant 0 : index
    %167 = vector.load %arg1[%c31, %c0_91, %c0_92] : memref<200x8x128xf32, #tpu.memory_space<vmem>>, vector<1x8x128xf32>
    %168 = vector.shape_cast %167 : vector<1x8x128xf32> to vector<8x128xf32>
    %169 = arith.mulf %15, %168 : vector<8x128xf32>
    %170 = arith.addf %166, %169 : vector<8x128xf32>
    %c47 = arith.constant 47 : index
    %c0_93 = arith.constant 0 : index
    %c0_94 = arith.constant 0 : index
    %171 = vector.load %arg1[%c47, %c0_93, %c0_94] : memref<200x8x128xf32, #tpu.memory_space<vmem>>, vector<1x8x128xf32>
    %172 = vector.shape_cast %171 : vector<1x8x128xf32> to vector<8x128xf32>
    %173 = arith.addf %170, %172 : vector<8x128xf32>
    %cst_95 = arith.constant 0.000000e+00 : f32
    %174 = vector.broadcast %cst_95 : f32 to vector<8x128xf32>
    %175 = arith.maximumf %173, %174 : vector<8x128xf32>
    %c32 = arith.constant 32 : index
    %c0_96 = arith.constant 0 : index
    %c0_97 = arith.constant 0 : index
    %176 = vector.load %arg1[%c32, %c0_96, %c0_97] : memref<200x8x128xf32, #tpu.memory_space<vmem>>, vector<1x8x128xf32>
    %177 = vector.shape_cast %176 : vector<1x8x128xf32> to vector<8x128xf32>
    %178 = arith.mulf %6, %177 : vector<8x128xf32>
    %c33 = arith.constant 33 : index
    %c0_98 = arith.constant 0 : index
    %c0_99 = arith.constant 0 : index
    %179 = vector.load %arg1[%c33, %c0_98, %c0_99] : memref<200x8x128xf32, #tpu.memory_space<vmem>>, vector<1x8x128xf32>
    %180 = vector.shape_cast %179 : vector<1x8x128xf32> to vector<8x128xf32>
    %181 = arith.mulf %9, %180 : vector<8x128xf32>
    %182 = arith.addf %178, %181 : vector<8x128xf32>
    %c34 = arith.constant 34 : index
    %c0_100 = arith.constant 0 : index
    %c0_101 = arith.constant 0 : index
    %183 = vector.load %arg1[%c34, %c0_100, %c0_101] : memref<200x8x128xf32, #tpu.memory_space<vmem>>, vector<1x8x128xf32>
    %184 = vector.shape_cast %183 : vector<1x8x128xf32> to vector<8x128xf32>
    %185 = arith.mulf %12, %184 : vector<8x128xf32>
    %186 = arith.addf %182, %185 : vector<8x128xf32>
    %c35 = arith.constant 35 : index
    %c0_102 = arith.constant 0 : index
    %c0_103 = arith.constant 0 : index
    %187 = vector.load %arg1[%c35, %c0_102, %c0_103] : memref<200x8x128xf32, #tpu.memory_space<vmem>>, vector<1x8x128xf32>
    %188 = vector.shape_cast %187 : vector<1x8x128xf32> to vector<8x128xf32>
    %189 = arith.mulf %15, %188 : vector<8x128xf32>
    %190 = arith.addf %186, %189 : vector<8x128xf32>
    %c48 = arith.constant 48 : index
    %c0_104 = arith.constant 0 : index
    %c0_105 = arith.constant 0 : index
    %191 = vector.load %arg1[%c48, %c0_104, %c0_105] : memref<200x8x128xf32, #tpu.memory_space<vmem>>, vector<1x8x128xf32>
    %192 = vector.shape_cast %191 : vector<1x8x128xf32> to vector<8x128xf32>
    %193 = arith.addf %190, %192 : vector<8x128xf32>
    %cst_106 = arith.constant 0.000000e+00 : f32
    %194 = vector.broadcast %cst_106 : f32 to vector<8x128xf32>
    %195 = arith.maximumf %193, %194 : vector<8x128xf32>
    %c36 = arith.constant 36 : index
    %c0_107 = arith.constant 0 : index
    %c0_108 = arith.constant 0 : index
    %196 = vector.load %arg1[%c36, %c0_107, %c0_108] : memref<200x8x128xf32, #tpu.memory_space<vmem>>, vector<1x8x128xf32>
    %197 = vector.shape_cast %196 : vector<1x8x128xf32> to vector<8x128xf32>
    %198 = arith.mulf %6, %197 : vector<8x128xf32>
    %c37 = arith.constant 37 : index
    %c0_109 = arith.constant 0 : index
    %c0_110 = arith.constant 0 : index
    %199 = vector.load %arg1[%c37, %c0_109, %c0_110] : memref<200x8x128xf32, #tpu.memory_space<vmem>>, vector<1x8x128xf32>
    %200 = vector.shape_cast %199 : vector<1x8x128xf32> to vector<8x128xf32>
    %201 = arith.mulf %9, %200 : vector<8x128xf32>
    %202 = arith.addf %198, %201 : vector<8x128xf32>
    %c38 = arith.constant 38 : index
    %c0_111 = arith.constant 0 : index
    %c0_112 = arith.constant 0 : index
    %203 = vector.load %arg1[%c38, %c0_111, %c0_112] : memref<200x8x128xf32, #tpu.memory_space<vmem>>, vector<1x8x128xf32>
    %204 = vector.shape_cast %203 : vector<1x8x128xf32> to vector<8x128xf32>
    %205 = arith.mulf %12, %204 : vector<8x128xf32>
    %206 = arith.addf %202, %205 : vector<8x128xf32>
    %c39 = arith.constant 39 : index
    %c0_113 = arith.constant 0 : index
    %c0_114 = arith.constant 0 : index
    %207 = vector.load %arg1[%c39, %c0_113, %c0_114] : memref<200x8x128xf32, #tpu.memory_space<vmem>>, vector<1x8x128xf32>
    %208 = vector.shape_cast %207 : vector<1x8x128xf32> to vector<8x128xf32>
    %209 = arith.mulf %15, %208 : vector<8x128xf32>
    %210 = arith.addf %206, %209 : vector<8x128xf32>
    %c49 = arith.constant 49 : index
    %c0_115 = arith.constant 0 : index
    %c0_116 = arith.constant 0 : index
    %211 = vector.load %arg1[%c49, %c0_115, %c0_116] : memref<200x8x128xf32, #tpu.memory_space<vmem>>, vector<1x8x128xf32>
    %212 = vector.shape_cast %211 : vector<1x8x128xf32> to vector<8x128xf32>
    %213 = arith.addf %210, %212 : vector<8x128xf32>
    %cst_117 = arith.constant 0.000000e+00 : f32
    %214 = vector.broadcast %cst_117 : f32 to vector<8x128xf32>
    %215 = arith.maximumf %213, %214 : vector<8x128xf32>
    %c50 = arith.constant 50 : index
    %c0_118 = arith.constant 0 : index
    %c0_119 = arith.constant 0 : index
    %216 = vector.load %arg1[%c50, %c0_118, %c0_119] : memref<200x8x128xf32, #tpu.memory_space<vmem>>, vector<1x8x128xf32>
    %217 = vector.shape_cast %216 : vector<1x8x128xf32> to vector<8x128xf32>
    %218 = arith.mulf %35, %217 : vector<8x128xf32>
    %c51 = arith.constant 51 : index
    %c0_120 = arith.constant 0 : index
    %c0_121 = arith.constant 0 : index
    %219 = vector.load %arg1[%c51, %c0_120, %c0_121] : memref<200x8x128xf32, #tpu.memory_space<vmem>>, vector<1x8x128xf32>
    %220 = vector.shape_cast %219 : vector<1x8x128xf32> to vector<8x128xf32>
    %221 = arith.mulf %55, %220 : vector<8x128xf32>
    %222 = arith.addf %218, %221 : vector<8x128xf32>
    %c52 = arith.constant 52 : index
    %c0_122 = arith.constant 0 : index
    %c0_123 = arith.constant 0 : index
    %223 = vector.load %arg1[%c52, %c0_122, %c0_123] : memref<200x8x128xf32, #tpu.memory_space<vmem>>, vector<1x8x128xf32>
    %224 = vector.shape_cast %223 : vector<1x8x128xf32> to vector<8x128xf32>
    %225 = arith.mulf %75, %224 : vector<8x128xf32>
    %226 = arith.addf %222, %225 : vector<8x128xf32>
    %c53 = arith.constant 53 : index
    %c0_124 = arith.constant 0 : index
    %c0_125 = arith.constant 0 : index
    %227 = vector.load %arg1[%c53, %c0_124, %c0_125] : memref<200x8x128xf32, #tpu.memory_space<vmem>>, vector<1x8x128xf32>
    %228 = vector.shape_cast %227 : vector<1x8x128xf32> to vector<8x128xf32>
    %229 = arith.mulf %95, %228 : vector<8x128xf32>
    %230 = arith.addf %226, %229 : vector<8x128xf32>
    %c54 = arith.constant 54 : index
    %c0_126 = arith.constant 0 : index
    %c0_127 = arith.constant 0 : index
    %231 = vector.load %arg1[%c54, %c0_126, %c0_127] : memref<200x8x128xf32, #tpu.memory_space<vmem>>, vector<1x8x128xf32>
    %232 = vector.shape_cast %231 : vector<1x8x128xf32> to vector<8x128xf32>
    %233 = arith.mulf %115, %232 : vector<8x128xf32>
    %234 = arith.addf %230, %233 : vector<8x128xf32>
    %c55 = arith.constant 55 : index
    %c0_128 = arith.constant 0 : index
    %c0_129 = arith.constant 0 : index
    %235 = vector.load %arg1[%c55, %c0_128, %c0_129] : memref<200x8x128xf32, #tpu.memory_space<vmem>>, vector<1x8x128xf32>
    %236 = vector.shape_cast %235 : vector<1x8x128xf32> to vector<8x128xf32>
    %237 = arith.mulf %135, %236 : vector<8x128xf32>
    %238 = arith.addf %234, %237 : vector<8x128xf32>
    %c56 = arith.constant 56 : index
    %c0_130 = arith.constant 0 : index
    %c0_131 = arith.constant 0 : index
    %239 = vector.load %arg1[%c56, %c0_130, %c0_131] : memref<200x8x128xf32, #tpu.memory_space<vmem>>, vector<1x8x128xf32>
    %240 = vector.shape_cast %239 : vector<1x8x128xf32> to vector<8x128xf32>
    %241 = arith.mulf %155, %240 : vector<8x128xf32>
    %242 = arith.addf %238, %241 : vector<8x128xf32>
    %c57 = arith.constant 57 : index
    %c0_132 = arith.constant 0 : index
    %c0_133 = arith.constant 0 : index
    %243 = vector.load %arg1[%c57, %c0_132, %c0_133] : memref<200x8x128xf32, #tpu.memory_space<vmem>>, vector<1x8x128xf32>
    %244 = vector.shape_cast %243 : vector<1x8x128xf32> to vector<8x128xf32>
    %245 = arith.mulf %175, %244 : vector<8x128xf32>
    %246 = arith.addf %242, %245 : vector<8x128xf32>
    %c58 = arith.constant 58 : index
    %c0_134 = arith.constant 0 : index
    %c0_135 = arith.constant 0 : index
    %247 = vector.load %arg1[%c58, %c0_134, %c0_135] : memref<200x8x128xf32, #tpu.memory_space<vmem>>, vector<1x8x128xf32>
    %248 = vector.shape_cast %247 : vector<1x8x128xf32> to vector<8x128xf32>
    %249 = arith.mulf %195, %248 : vector<8x128xf32>
    %250 = arith.addf %246, %249 : vector<8x128xf32>
    %c59 = arith.constant 59 : index
    %c0_136 = arith.constant 0 : index
    %c0_137 = arith.constant 0 : index
    %251 = vector.load %arg1[%c59, %c0_136, %c0_137] : memref<200x8x128xf32, #tpu.memory_space<vmem>>, vector<1x8x128xf32>
    %252 = vector.shape_cast %251 : vector<1x8x128xf32> to vector<8x128xf32>
    %253 = arith.mulf %215, %252 : vector<8x128xf32>
    %254 = arith.addf %250, %253 : vector<8x128xf32>
    %c150 = arith.constant 150 : index
    %c0_138 = arith.constant 0 : index
    %c0_139 = arith.constant 0 : index
    %255 = vector.load %arg1[%c150, %c0_138, %c0_139] : memref<200x8x128xf32, #tpu.memory_space<vmem>>, vector<1x8x128xf32>
    %256 = vector.shape_cast %255 : vector<1x8x128xf32> to vector<8x128xf32>
    %257 = arith.addf %254, %256 : vector<8x128xf32>
    %cst_140 = arith.constant 0.000000e+00 : f32
    %258 = vector.broadcast %cst_140 : f32 to vector<8x128xf32>
    %259 = arith.maximumf %257, %258 : vector<8x128xf32>
    %c60 = arith.constant 60 : index
    %c0_141 = arith.constant 0 : index
    %c0_142 = arith.constant 0 : index
    %260 = vector.load %arg1[%c60, %c0_141, %c0_142] : memref<200x8x128xf32, #tpu.memory_space<vmem>>, vector<1x8x128xf32>
    %261 = vector.shape_cast %260 : vector<1x8x128xf32> to vector<8x128xf32>
    %262 = arith.mulf %35, %261 : vector<8x128xf32>
    %c61 = arith.constant 61 : index
    %c0_143 = arith.constant 0 : index
    %c0_144 = arith.constant 0 : index
    %263 = vector.load %arg1[%c61, %c0_143, %c0_144] : memref<200x8x128xf32, #tpu.memory_space<vmem>>, vector<1x8x128xf32>
    %264 = vector.shape_cast %263 : vector<1x8x128xf32> to vector<8x128xf32>
    %265 = arith.mulf %55, %264 : vector<8x128xf32>
    %266 = arith.addf %262, %265 : vector<8x128xf32>
    %c62 = arith.constant 62 : index
    %c0_145 = arith.constant 0 : index
    %c0_146 = arith.constant 0 : index
    %267 = vector.load %arg1[%c62, %c0_145, %c0_146] : memref<200x8x128xf32, #tpu.memory_space<vmem>>, vector<1x8x128xf32>
    %268 = vector.shape_cast %267 : vector<1x8x128xf32> to vector<8x128xf32>
    %269 = arith.mulf %75, %268 : vector<8x128xf32>
    %270 = arith.addf %266, %269 : vector<8x128xf32>
    %c63 = arith.constant 63 : index
    %c0_147 = arith.constant 0 : index
    %c0_148 = arith.constant 0 : index
    %271 = vector.load %arg1[%c63, %c0_147, %c0_148] : memref<200x8x128xf32, #tpu.memory_space<vmem>>, vector<1x8x128xf32>
    %272 = vector.shape_cast %271 : vector<1x8x128xf32> to vector<8x128xf32>
    %273 = arith.mulf %95, %272 : vector<8x128xf32>
    %274 = arith.addf %270, %273 : vector<8x128xf32>
    %c64 = arith.constant 64 : index
    %c0_149 = arith.constant 0 : index
    %c0_150 = arith.constant 0 : index
    %275 = vector.load %arg1[%c64, %c0_149, %c0_150] : memref<200x8x128xf32, #tpu.memory_space<vmem>>, vector<1x8x128xf32>
    %276 = vector.shape_cast %275 : vector<1x8x128xf32> to vector<8x128xf32>
    %277 = arith.mulf %115, %276 : vector<8x128xf32>
    %278 = arith.addf %274, %277 : vector<8x128xf32>
    %c65 = arith.constant 65 : index
    %c0_151 = arith.constant 0 : index
    %c0_152 = arith.constant 0 : index
    %279 = vector.load %arg1[%c65, %c0_151, %c0_152] : memref<200x8x128xf32, #tpu.memory_space<vmem>>, vector<1x8x128xf32>
    %280 = vector.shape_cast %279 : vector<1x8x128xf32> to vector<8x128xf32>
    %281 = arith.mulf %135, %280 : vector<8x128xf32>
    %282 = arith.addf %278, %281 : vector<8x128xf32>
    %c66 = arith.constant 66 : index
    %c0_153 = arith.constant 0 : index
    %c0_154 = arith.constant 0 : index
    %283 = vector.load %arg1[%c66, %c0_153, %c0_154] : memref<200x8x128xf32, #tpu.memory_space<vmem>>, vector<1x8x128xf32>
    %284 = vector.shape_cast %283 : vector<1x8x128xf32> to vector<8x128xf32>
    %285 = arith.mulf %155, %284 : vector<8x128xf32>
    %286 = arith.addf %282, %285 : vector<8x128xf32>
    %c67 = arith.constant 67 : index
    %c0_155 = arith.constant 0 : index
    %c0_156 = arith.constant 0 : index
    %287 = vector.load %arg1[%c67, %c0_155, %c0_156] : memref<200x8x128xf32, #tpu.memory_space<vmem>>, vector<1x8x128xf32>
    %288 = vector.shape_cast %287 : vector<1x8x128xf32> to vector<8x128xf32>
    %289 = arith.mulf %175, %288 : vector<8x128xf32>
    %290 = arith.addf %286, %289 : vector<8x128xf32>
    %c68 = arith.constant 68 : index
    %c0_157 = arith.constant 0 : index
    %c0_158 = arith.constant 0 : index
    %291 = vector.load %arg1[%c68, %c0_157, %c0_158] : memref<200x8x128xf32, #tpu.memory_space<vmem>>, vector<1x8x128xf32>
    %292 = vector.shape_cast %291 : vector<1x8x128xf32> to vector<8x128xf32>
    %293 = arith.mulf %195, %292 : vector<8x128xf32>
    %294 = arith.addf %290, %293 : vector<8x128xf32>
    %c69 = arith.constant 69 : index
    %c0_159 = arith.constant 0 : index
    %c0_160 = arith.constant 0 : index
    %295 = vector.load %arg1[%c69, %c0_159, %c0_160] : memref<200x8x128xf32, #tpu.memory_space<vmem>>, vector<1x8x128xf32>
    %296 = vector.shape_cast %295 : vector<1x8x128xf32> to vector<8x128xf32>
    %297 = arith.mulf %215, %296 : vector<8x128xf32>
    %298 = arith.addf %294, %297 : vector<8x128xf32>
    %c151 = arith.constant 151 : index
    %c0_161 = arith.constant 0 : index
    %c0_162 = arith.constant 0 : index
    %299 = vector.load %arg1[%c151, %c0_161, %c0_162] : memref<200x8x128xf32, #tpu.memory_space<vmem>>, vector<1x8x128xf32>
    %300 = vector.shape_cast %299 : vector<1x8x128xf32> to vector<8x128xf32>
    %301 = arith.addf %298, %300 : vector<8x128xf32>
    %cst_163 = arith.constant 0.000000e+00 : f32
    %302 = vector.broadcast %cst_163 : f32 to vector<8x128xf32>
    %303 = arith.maximumf %301, %302 : vector<8x128xf32>
    %c70 = arith.constant 70 : index
    %c0_164 = arith.constant 0 : index
    %c0_165 = arith.constant 0 : index
    %304 = vector.load %arg1[%c70, %c0_164, %c0_165] : memref<200x8x128xf32, #tpu.memory_space<vmem>>, vector<1x8x128xf32>
    %305 = vector.shape_cast %304 : vector<1x8x128xf32> to vector<8x128xf32>
    %306 = arith.mulf %35, %305 : vector<8x128xf32>
    %c71 = arith.constant 71 : index
    %c0_166 = arith.constant 0 : index
    %c0_167 = arith.constant 0 : index
    %307 = vector.load %arg1[%c71, %c0_166, %c0_167] : memref<200x8x128xf32, #tpu.memory_space<vmem>>, vector<1x8x128xf32>
    %308 = vector.shape_cast %307 : vector<1x8x128xf32> to vector<8x128xf32>
    %309 = arith.mulf %55, %308 : vector<8x128xf32>
    %310 = arith.addf %306, %309 : vector<8x128xf32>
    %c72 = arith.constant 72 : index
    %c0_168 = arith.constant 0 : index
    %c0_169 = arith.constant 0 : index
    %311 = vector.load %arg1[%c72, %c0_168, %c0_169] : memref<200x8x128xf32, #tpu.memory_space<vmem>>, vector<1x8x128xf32>
    %312 = vector.shape_cast %311 : vector<1x8x128xf32> to vector<8x128xf32>
    %313 = arith.mulf %75, %312 : vector<8x128xf32>
    %314 = arith.addf %310, %313 : vector<8x128xf32>
    %c73 = arith.constant 73 : index
    %c0_170 = arith.constant 0 : index
    %c0_171 = arith.constant 0 : index
    %315 = vector.load %arg1[%c73, %c0_170, %c0_171] : memref<200x8x128xf32, #tpu.memory_space<vmem>>, vector<1x8x128xf32>
    %316 = vector.shape_cast %315 : vector<1x8x128xf32> to vector<8x128xf32>
    %317 = arith.mulf %95, %316 : vector<8x128xf32>
    %318 = arith.addf %314, %317 : vector<8x128xf32>
    %c74 = arith.constant 74 : index
    %c0_172 = arith.constant 0 : index
    %c0_173 = arith.constant 0 : index
    %319 = vector.load %arg1[%c74, %c0_172, %c0_173] : memref<200x8x128xf32, #tpu.memory_space<vmem>>, vector<1x8x128xf32>
    %320 = vector.shape_cast %319 : vector<1x8x128xf32> to vector<8x128xf32>
    %321 = arith.mulf %115, %320 : vector<8x128xf32>
    %322 = arith.addf %318, %321 : vector<8x128xf32>
    %c75 = arith.constant 75 : index
    %c0_174 = arith.constant 0 : index
    %c0_175 = arith.constant 0 : index
    %323 = vector.load %arg1[%c75, %c0_174, %c0_175] : memref<200x8x128xf32, #tpu.memory_space<vmem>>, vector<1x8x128xf32>
    %324 = vector.shape_cast %323 : vector<1x8x128xf32> to vector<8x128xf32>
    %325 = arith.mulf %135, %324 : vector<8x128xf32>
    %326 = arith.addf %322, %325 : vector<8x128xf32>
    %c76 = arith.constant 76 : index
    %c0_176 = arith.constant 0 : index
    %c0_177 = arith.constant 0 : index
    %327 = vector.load %arg1[%c76, %c0_176, %c0_177] : memref<200x8x128xf32, #tpu.memory_space<vmem>>, vector<1x8x128xf32>
    %328 = vector.shape_cast %327 : vector<1x8x128xf32> to vector<8x128xf32>
    %329 = arith.mulf %155, %328 : vector<8x128xf32>
    %330 = arith.addf %326, %329 : vector<8x128xf32>
    %c77 = arith.constant 77 : index
    %c0_178 = arith.constant 0 : index
    %c0_179 = arith.constant 0 : index
    %331 = vector.load %arg1[%c77, %c0_178, %c0_179] : memref<200x8x128xf32, #tpu.memory_space<vmem>>, vector<1x8x128xf32>
    %332 = vector.shape_cast %331 : vector<1x8x128xf32> to vector<8x128xf32>
    %333 = arith.mulf %175, %332 : vector<8x128xf32>
    %334 = arith.addf %330, %333 : vector<8x128xf32>
    %c78 = arith.constant 78 : index
    %c0_180 = arith.constant 0 : index
    %c0_181 = arith.constant 0 : index
    %335 = vector.load %arg1[%c78, %c0_180, %c0_181] : memref<200x8x128xf32, #tpu.memory_space<vmem>>, vector<1x8x128xf32>
    %336 = vector.shape_cast %335 : vector<1x8x128xf32> to vector<8x128xf32>
    %337 = arith.mulf %195, %336 : vector<8x128xf32>
    %338 = arith.addf %334, %337 : vector<8x128xf32>
    %c79 = arith.constant 79 : index
    %c0_182 = arith.constant 0 : index
    %c0_183 = arith.constant 0 : index
    %339 = vector.load %arg1[%c79, %c0_182, %c0_183] : memref<200x8x128xf32, #tpu.memory_space<vmem>>, vector<1x8x128xf32>
    %340 = vector.shape_cast %339 : vector<1x8x128xf32> to vector<8x128xf32>
    %341 = arith.mulf %215, %340 : vector<8x128xf32>
    %342 = arith.addf %338, %341 : vector<8x128xf32>
    %c152 = arith.constant 152 : index
    %c0_184 = arith.constant 0 : index
    %c0_185 = arith.constant 0 : index
    %343 = vector.load %arg1[%c152, %c0_184, %c0_185] : memref<200x8x128xf32, #tpu.memory_space<vmem>>, vector<1x8x128xf32>
    %344 = vector.shape_cast %343 : vector<1x8x128xf32> to vector<8x128xf32>
    %345 = arith.addf %342, %344 : vector<8x128xf32>
    %cst_186 = arith.constant 0.000000e+00 : f32
    %346 = vector.broadcast %cst_186 : f32 to vector<8x128xf32>
    %347 = arith.maximumf %345, %346 : vector<8x128xf32>
    %c80 = arith.constant 80 : index
    %c0_187 = arith.constant 0 : index
    %c0_188 = arith.constant 0 : index
    %348 = vector.load %arg1[%c80, %c0_187, %c0_188] : memref<200x8x128xf32, #tpu.memory_space<vmem>>, vector<1x8x128xf32>
    %349 = vector.shape_cast %348 : vector<1x8x128xf32> to vector<8x128xf32>
    %350 = arith.mulf %35, %349 : vector<8x128xf32>
    %c81 = arith.constant 81 : index
    %c0_189 = arith.constant 0 : index
    %c0_190 = arith.constant 0 : index
    %351 = vector.load %arg1[%c81, %c0_189, %c0_190] : memref<200x8x128xf32, #tpu.memory_space<vmem>>, vector<1x8x128xf32>
    %352 = vector.shape_cast %351 : vector<1x8x128xf32> to vector<8x128xf32>
    %353 = arith.mulf %55, %352 : vector<8x128xf32>
    %354 = arith.addf %350, %353 : vector<8x128xf32>
    %c82 = arith.constant 82 : index
    %c0_191 = arith.constant 0 : index
    %c0_192 = arith.constant 0 : index
    %355 = vector.load %arg1[%c82, %c0_191, %c0_192] : memref<200x8x128xf32, #tpu.memory_space<vmem>>, vector<1x8x128xf32>
    %356 = vector.shape_cast %355 : vector<1x8x128xf32> to vector<8x128xf32>
    %357 = arith.mulf %75, %356 : vector<8x128xf32>
    %358 = arith.addf %354, %357 : vector<8x128xf32>
    %c83 = arith.constant 83 : index
    %c0_193 = arith.constant 0 : index
    %c0_194 = arith.constant 0 : index
    %359 = vector.load %arg1[%c83, %c0_193, %c0_194] : memref<200x8x128xf32, #tpu.memory_space<vmem>>, vector<1x8x128xf32>
    %360 = vector.shape_cast %359 : vector<1x8x128xf32> to vector<8x128xf32>
    %361 = arith.mulf %95, %360 : vector<8x128xf32>
    %362 = arith.addf %358, %361 : vector<8x128xf32>
    %c84 = arith.constant 84 : index
    %c0_195 = arith.constant 0 : index
    %c0_196 = arith.constant 0 : index
    %363 = vector.load %arg1[%c84, %c0_195, %c0_196] : memref<200x8x128xf32, #tpu.memory_space<vmem>>, vector<1x8x128xf32>
    %364 = vector.shape_cast %363 : vector<1x8x128xf32> to vector<8x128xf32>
    %365 = arith.mulf %115, %364 : vector<8x128xf32>
    %366 = arith.addf %362, %365 : vector<8x128xf32>
    %c85 = arith.constant 85 : index
    %c0_197 = arith.constant 0 : index
    %c0_198 = arith.constant 0 : index
    %367 = vector.load %arg1[%c85, %c0_197, %c0_198] : memref<200x8x128xf32, #tpu.memory_space<vmem>>, vector<1x8x128xf32>
    %368 = vector.shape_cast %367 : vector<1x8x128xf32> to vector<8x128xf32>
    %369 = arith.mulf %135, %368 : vector<8x128xf32>
    %370 = arith.addf %366, %369 : vector<8x128xf32>
    %c86 = arith.constant 86 : index
    %c0_199 = arith.constant 0 : index
    %c0_200 = arith.constant 0 : index
    %371 = vector.load %arg1[%c86, %c0_199, %c0_200] : memref<200x8x128xf32, #tpu.memory_space<vmem>>, vector<1x8x128xf32>
    %372 = vector.shape_cast %371 : vector<1x8x128xf32> to vector<8x128xf32>
    %373 = arith.mulf %155, %372 : vector<8x128xf32>
    %374 = arith.addf %370, %373 : vector<8x128xf32>
    %c87 = arith.constant 87 : index
    %c0_201 = arith.constant 0 : index
    %c0_202 = arith.constant 0 : index
    %375 = vector.load %arg1[%c87, %c0_201, %c0_202] : memref<200x8x128xf32, #tpu.memory_space<vmem>>, vector<1x8x128xf32>
    %376 = vector.shape_cast %375 : vector<1x8x128xf32> to vector<8x128xf32>
    %377 = arith.mulf %175, %376 : vector<8x128xf32>
    %378 = arith.addf %374, %377 : vector<8x128xf32>
    %c88 = arith.constant 88 : index
    %c0_203 = arith.constant 0 : index
    %c0_204 = arith.constant 0 : index
    %379 = vector.load %arg1[%c88, %c0_203, %c0_204] : memref<200x8x128xf32, #tpu.memory_space<vmem>>, vector<1x8x128xf32>
    %380 = vector.shape_cast %379 : vector<1x8x128xf32> to vector<8x128xf32>
    %381 = arith.mulf %195, %380 : vector<8x128xf32>
    %382 = arith.addf %378, %381 : vector<8x128xf32>
    %c89 = arith.constant 89 : index
    %c0_205 = arith.constant 0 : index
    %c0_206 = arith.constant 0 : index
    %383 = vector.load %arg1[%c89, %c0_205, %c0_206] : memref<200x8x128xf32, #tpu.memory_space<vmem>>, vector<1x8x128xf32>
    %384 = vector.shape_cast %383 : vector<1x8x128xf32> to vector<8x128xf32>
    %385 = arith.mulf %215, %384 : vector<8x128xf32>
    %386 = arith.addf %382, %385 : vector<8x128xf32>
    %c153 = arith.constant 153 : index
    %c0_207 = arith.constant 0 : index
    %c0_208 = arith.constant 0 : index
    %387 = vector.load %arg1[%c153, %c0_207, %c0_208] : memref<200x8x128xf32, #tpu.memory_space<vmem>>, vector<1x8x128xf32>
    %388 = vector.shape_cast %387 : vector<1x8x128xf32> to vector<8x128xf32>
    %389 = arith.addf %386, %388 : vector<8x128xf32>
    %cst_209 = arith.constant 0.000000e+00 : f32
    %390 = vector.broadcast %cst_209 : f32 to vector<8x128xf32>
    %391 = arith.maximumf %389, %390 : vector<8x128xf32>
    %c90 = arith.constant 90 : index
    %c0_210 = arith.constant 0 : index
    %c0_211 = arith.constant 0 : index
    %392 = vector.load %arg1[%c90, %c0_210, %c0_211] : memref<200x8x128xf32, #tpu.memory_space<vmem>>, vector<1x8x128xf32>
    %393 = vector.shape_cast %392 : vector<1x8x128xf32> to vector<8x128xf32>
    %394 = arith.mulf %35, %393 : vector<8x128xf32>
    %c91 = arith.constant 91 : index
    %c0_212 = arith.constant 0 : index
    %c0_213 = arith.constant 0 : index
    %395 = vector.load %arg1[%c91, %c0_212, %c0_213] : memref<200x8x128xf32, #tpu.memory_space<vmem>>, vector<1x8x128xf32>
    %396 = vector.shape_cast %395 : vector<1x8x128xf32> to vector<8x128xf32>
    %397 = arith.mulf %55, %396 : vector<8x128xf32>
    %398 = arith.addf %394, %397 : vector<8x128xf32>
    %c92 = arith.constant 92 : index
    %c0_214 = arith.constant 0 : index
    %c0_215 = arith.constant 0 : index
    %399 = vector.load %arg1[%c92, %c0_214, %c0_215] : memref<200x8x128xf32, #tpu.memory_space<vmem>>, vector<1x8x128xf32>
    %400 = vector.shape_cast %399 : vector<1x8x128xf32> to vector<8x128xf32>
    %401 = arith.mulf %75, %400 : vector<8x128xf32>
    %402 = arith.addf %398, %401 : vector<8x128xf32>
    %c93 = arith.constant 93 : index
    %c0_216 = arith.constant 0 : index
    %c0_217 = arith.constant 0 : index
    %403 = vector.load %arg1[%c93, %c0_216, %c0_217] : memref<200x8x128xf32, #tpu.memory_space<vmem>>, vector<1x8x128xf32>
    %404 = vector.shape_cast %403 : vector<1x8x128xf32> to vector<8x128xf32>
    %405 = arith.mulf %95, %404 : vector<8x128xf32>
    %406 = arith.addf %402, %405 : vector<8x128xf32>
    %c94 = arith.constant 94 : index
    %c0_218 = arith.constant 0 : index
    %c0_219 = arith.constant 0 : index
    %407 = vector.load %arg1[%c94, %c0_218, %c0_219] : memref<200x8x128xf32, #tpu.memory_space<vmem>>, vector<1x8x128xf32>
    %408 = vector.shape_cast %407 : vector<1x8x128xf32> to vector<8x128xf32>
    %409 = arith.mulf %115, %408 : vector<8x128xf32>
    %410 = arith.addf %406, %409 : vector<8x128xf32>
    %c95 = arith.constant 95 : index
    %c0_220 = arith.constant 0 : index
    %c0_221 = arith.constant 0 : index
    %411 = vector.load %arg1[%c95, %c0_220, %c0_221] : memref<200x8x128xf32, #tpu.memory_space<vmem>>, vector<1x8x128xf32>
    %412 = vector.shape_cast %411 : vector<1x8x128xf32> to vector<8x128xf32>
    %413 = arith.mulf %135, %412 : vector<8x128xf32>
    %414 = arith.addf %410, %413 : vector<8x128xf32>
    %c96 = arith.constant 96 : index
    %c0_222 = arith.constant 0 : index
    %c0_223 = arith.constant 0 : index
    %415 = vector.load %arg1[%c96, %c0_222, %c0_223] : memref<200x8x128xf32, #tpu.memory_space<vmem>>, vector<1x8x128xf32>
    %416 = vector.shape_cast %415 : vector<1x8x128xf32> to vector<8x128xf32>
    %417 = arith.mulf %155, %416 : vector<8x128xf32>
    %418 = arith.addf %414, %417 : vector<8x128xf32>
    %c97 = arith.constant 97 : index
    %c0_224 = arith.constant 0 : index
    %c0_225 = arith.constant 0 : index
    %419 = vector.load %arg1[%c97, %c0_224, %c0_225] : memref<200x8x128xf32, #tpu.memory_space<vmem>>, vector<1x8x128xf32>
    %420 = vector.shape_cast %419 : vector<1x8x128xf32> to vector<8x128xf32>
    %421 = arith.mulf %175, %420 : vector<8x128xf32>
    %422 = arith.addf %418, %421 : vector<8x128xf32>
    %c98 = arith.constant 98 : index
    %c0_226 = arith.constant 0 : index
    %c0_227 = arith.constant 0 : index
    %423 = vector.load %arg1[%c98, %c0_226, %c0_227] : memref<200x8x128xf32, #tpu.memory_space<vmem>>, vector<1x8x128xf32>
    %424 = vector.shape_cast %423 : vector<1x8x128xf32> to vector<8x128xf32>
    %425 = arith.mulf %195, %424 : vector<8x128xf32>
    %426 = arith.addf %422, %425 : vector<8x128xf32>
    %c99 = arith.constant 99 : index
    %c0_228 = arith.constant 0 : index
    %c0_229 = arith.constant 0 : index
    %427 = vector.load %arg1[%c99, %c0_228, %c0_229] : memref<200x8x128xf32, #tpu.memory_space<vmem>>, vector<1x8x128xf32>
    %428 = vector.shape_cast %427 : vector<1x8x128xf32> to vector<8x128xf32>
    %429 = arith.mulf %215, %428 : vector<8x128xf32>
    %430 = arith.addf %426, %429 : vector<8x128xf32>
    %c154 = arith.constant 154 : index
    %c0_230 = arith.constant 0 : index
    %c0_231 = arith.constant 0 : index
    %431 = vector.load %arg1[%c154, %c0_230, %c0_231] : memref<200x8x128xf32, #tpu.memory_space<vmem>>, vector<1x8x128xf32>
    %432 = vector.shape_cast %431 : vector<1x8x128xf32> to vector<8x128xf32>
    %433 = arith.addf %430, %432 : vector<8x128xf32>
    %cst_232 = arith.constant 0.000000e+00 : f32
    %434 = vector.broadcast %cst_232 : f32 to vector<8x128xf32>
    %435 = arith.maximumf %433, %434 : vector<8x128xf32>
    %c100 = arith.constant 100 : index
    %c0_233 = arith.constant 0 : index
    %c0_234 = arith.constant 0 : index
    %436 = vector.load %arg1[%c100, %c0_233, %c0_234] : memref<200x8x128xf32, #tpu.memory_space<vmem>>, vector<1x8x128xf32>
    %437 = vector.shape_cast %436 : vector<1x8x128xf32> to vector<8x128xf32>
    %438 = arith.mulf %35, %437 : vector<8x128xf32>
    %c101 = arith.constant 101 : index
    %c0_235 = arith.constant 0 : index
    %c0_236 = arith.constant 0 : index
    %439 = vector.load %arg1[%c101, %c0_235, %c0_236] : memref<200x8x128xf32, #tpu.memory_space<vmem>>, vector<1x8x128xf32>
    %440 = vector.shape_cast %439 : vector<1x8x128xf32> to vector<8x128xf32>
    %441 = arith.mulf %55, %440 : vector<8x128xf32>
    %442 = arith.addf %438, %441 : vector<8x128xf32>
    %c102 = arith.constant 102 : index
    %c0_237 = arith.constant 0 : index
    %c0_238 = arith.constant 0 : index
    %443 = vector.load %arg1[%c102, %c0_237, %c0_238] : memref<200x8x128xf32, #tpu.memory_space<vmem>>, vector<1x8x128xf32>
    %444 = vector.shape_cast %443 : vector<1x8x128xf32> to vector<8x128xf32>
    %445 = arith.mulf %75, %444 : vector<8x128xf32>
    %446 = arith.addf %442, %445 : vector<8x128xf32>
    %c103 = arith.constant 103 : index
    %c0_239 = arith.constant 0 : index
    %c0_240 = arith.constant 0 : index
    %447 = vector.load %arg1[%c103, %c0_239, %c0_240] : memref<200x8x128xf32, #tpu.memory_space<vmem>>, vector<1x8x128xf32>
    %448 = vector.shape_cast %447 : vector<1x8x128xf32> to vector<8x128xf32>
    %449 = arith.mulf %95, %448 : vector<8x128xf32>
    %450 = arith.addf %446, %449 : vector<8x128xf32>
    %c104 = arith.constant 104 : index
    %c0_241 = arith.constant 0 : index
    %c0_242 = arith.constant 0 : index
    %451 = vector.load %arg1[%c104, %c0_241, %c0_242] : memref<200x8x128xf32, #tpu.memory_space<vmem>>, vector<1x8x128xf32>
    %452 = vector.shape_cast %451 : vector<1x8x128xf32> to vector<8x128xf32>
    %453 = arith.mulf %115, %452 : vector<8x128xf32>
    %454 = arith.addf %450, %453 : vector<8x128xf32>
    %c105 = arith.constant 105 : index
    %c0_243 = arith.constant 0 : index
    %c0_244 = arith.constant 0 : index
    %455 = vector.load %arg1[%c105, %c0_243, %c0_244] : memref<200x8x128xf32, #tpu.memory_space<vmem>>, vector<1x8x128xf32>
    %456 = vector.shape_cast %455 : vector<1x8x128xf32> to vector<8x128xf32>
    %457 = arith.mulf %135, %456 : vector<8x128xf32>
    %458 = arith.addf %454, %457 : vector<8x128xf32>
    %c106 = arith.constant 106 : index
    %c0_245 = arith.constant 0 : index
    %c0_246 = arith.constant 0 : index
    %459 = vector.load %arg1[%c106, %c0_245, %c0_246] : memref<200x8x128xf32, #tpu.memory_space<vmem>>, vector<1x8x128xf32>
    %460 = vector.shape_cast %459 : vector<1x8x128xf32> to vector<8x128xf32>
    %461 = arith.mulf %155, %460 : vector<8x128xf32>
    %462 = arith.addf %458, %461 : vector<8x128xf32>
    %c107 = arith.constant 107 : index
    %c0_247 = arith.constant 0 : index
    %c0_248 = arith.constant 0 : index
    %463 = vector.load %arg1[%c107, %c0_247, %c0_248] : memref<200x8x128xf32, #tpu.memory_space<vmem>>, vector<1x8x128xf32>
    %464 = vector.shape_cast %463 : vector<1x8x128xf32> to vector<8x128xf32>
    %465 = arith.mulf %175, %464 : vector<8x128xf32>
    %466 = arith.addf %462, %465 : vector<8x128xf32>
    %c108 = arith.constant 108 : index
    %c0_249 = arith.constant 0 : index
    %c0_250 = arith.constant 0 : index
    %467 = vector.load %arg1[%c108, %c0_249, %c0_250] : memref<200x8x128xf32, #tpu.memory_space<vmem>>, vector<1x8x128xf32>
    %468 = vector.shape_cast %467 : vector<1x8x128xf32> to vector<8x128xf32>
    %469 = arith.mulf %195, %468 : vector<8x128xf32>
    %470 = arith.addf %466, %469 : vector<8x128xf32>
    %c109 = arith.constant 109 : index
    %c0_251 = arith.constant 0 : index
    %c0_252 = arith.constant 0 : index
    %471 = vector.load %arg1[%c109, %c0_251, %c0_252] : memref<200x8x128xf32, #tpu.memory_space<vmem>>, vector<1x8x128xf32>
    %472 = vector.shape_cast %471 : vector<1x8x128xf32> to vector<8x128xf32>
    %473 = arith.mulf %215, %472 : vector<8x128xf32>
    %474 = arith.addf %470, %473 : vector<8x128xf32>
    %c155 = arith.constant 155 : index
    %c0_253 = arith.constant 0 : index
    %c0_254 = arith.constant 0 : index
    %475 = vector.load %arg1[%c155, %c0_253, %c0_254] : memref<200x8x128xf32, #tpu.memory_space<vmem>>, vector<1x8x128xf32>
    %476 = vector.shape_cast %475 : vector<1x8x128xf32> to vector<8x128xf32>
    %477 = arith.addf %474, %476 : vector<8x128xf32>
    %cst_255 = arith.constant 0.000000e+00 : f32
    %478 = vector.broadcast %cst_255 : f32 to vector<8x128xf32>
    %479 = arith.maximumf %477, %478 : vector<8x128xf32>
    %c110 = arith.constant 110 : index
    %c0_256 = arith.constant 0 : index
    %c0_257 = arith.constant 0 : index
    %480 = vector.load %arg1[%c110, %c0_256, %c0_257] : memref<200x8x128xf32, #tpu.memory_space<vmem>>, vector<1x8x128xf32>
    %481 = vector.shape_cast %480 : vector<1x8x128xf32> to vector<8x128xf32>
    %482 = arith.mulf %35, %481 : vector<8x128xf32>
    %c111 = arith.constant 111 : index
    %c0_258 = arith.constant 0 : index
    %c0_259 = arith.constant 0 : index
    %483 = vector.load %arg1[%c111, %c0_258, %c0_259] : memref<200x8x128xf32, #tpu.memory_space<vmem>>, vector<1x8x128xf32>
    %484 = vector.shape_cast %483 : vector<1x8x128xf32> to vector<8x128xf32>
    %485 = arith.mulf %55, %484 : vector<8x128xf32>
    %486 = arith.addf %482, %485 : vector<8x128xf32>
    %c112 = arith.constant 112 : index
    %c0_260 = arith.constant 0 : index
    %c0_261 = arith.constant 0 : index
    %487 = vector.load %arg1[%c112, %c0_260, %c0_261] : memref<200x8x128xf32, #tpu.memory_space<vmem>>, vector<1x8x128xf32>
    %488 = vector.shape_cast %487 : vector<1x8x128xf32> to vector<8x128xf32>
    %489 = arith.mulf %75, %488 : vector<8x128xf32>
    %490 = arith.addf %486, %489 : vector<8x128xf32>
    %c113 = arith.constant 113 : index
    %c0_262 = arith.constant 0 : index
    %c0_263 = arith.constant 0 : index
    %491 = vector.load %arg1[%c113, %c0_262, %c0_263] : memref<200x8x128xf32, #tpu.memory_space<vmem>>, vector<1x8x128xf32>
    %492 = vector.shape_cast %491 : vector<1x8x128xf32> to vector<8x128xf32>
    %493 = arith.mulf %95, %492 : vector<8x128xf32>
    %494 = arith.addf %490, %493 : vector<8x128xf32>
    %c114 = arith.constant 114 : index
    %c0_264 = arith.constant 0 : index
    %c0_265 = arith.constant 0 : index
    %495 = vector.load %arg1[%c114, %c0_264, %c0_265] : memref<200x8x128xf32, #tpu.memory_space<vmem>>, vector<1x8x128xf32>
    %496 = vector.shape_cast %495 : vector<1x8x128xf32> to vector<8x128xf32>
    %497 = arith.mulf %115, %496 : vector<8x128xf32>
    %498 = arith.addf %494, %497 : vector<8x128xf32>
    %c115 = arith.constant 115 : index
    %c0_266 = arith.constant 0 : index
    %c0_267 = arith.constant 0 : index
    %499 = vector.load %arg1[%c115, %c0_266, %c0_267] : memref<200x8x128xf32, #tpu.memory_space<vmem>>, vector<1x8x128xf32>
    %500 = vector.shape_cast %499 : vector<1x8x128xf32> to vector<8x128xf32>
    %501 = arith.mulf %135, %500 : vector<8x128xf32>
    %502 = arith.addf %498, %501 : vector<8x128xf32>
    %c116 = arith.constant 116 : index
    %c0_268 = arith.constant 0 : index
    %c0_269 = arith.constant 0 : index
    %503 = vector.load %arg1[%c116, %c0_268, %c0_269] : memref<200x8x128xf32, #tpu.memory_space<vmem>>, vector<1x8x128xf32>
    %504 = vector.shape_cast %503 : vector<1x8x128xf32> to vector<8x128xf32>
    %505 = arith.mulf %155, %504 : vector<8x128xf32>
    %506 = arith.addf %502, %505 : vector<8x128xf32>
    %c117 = arith.constant 117 : index
    %c0_270 = arith.constant 0 : index
    %c0_271 = arith.constant 0 : index
    %507 = vector.load %arg1[%c117, %c0_270, %c0_271] : memref<200x8x128xf32, #tpu.memory_space<vmem>>, vector<1x8x128xf32>
    %508 = vector.shape_cast %507 : vector<1x8x128xf32> to vector<8x128xf32>
    %509 = arith.mulf %175, %508 : vector<8x128xf32>
    %510 = arith.addf %506, %509 : vector<8x128xf32>
    %c118 = arith.constant 118 : index
    %c0_272 = arith.constant 0 : index
    %c0_273 = arith.constant 0 : index
    %511 = vector.load %arg1[%c118, %c0_272, %c0_273] : memref<200x8x128xf32, #tpu.memory_space<vmem>>, vector<1x8x128xf32>
    %512 = vector.shape_cast %511 : vector<1x8x128xf32> to vector<8x128xf32>
    %513 = arith.mulf %195, %512 : vector<8x128xf32>
    %514 = arith.addf %510, %513 : vector<8x128xf32>
    %c119 = arith.constant 119 : index
    %c0_274 = arith.constant 0 : index
    %c0_275 = arith.constant 0 : index
    %515 = vector.load %arg1[%c119, %c0_274, %c0_275] : memref<200x8x128xf32, #tpu.memory_space<vmem>>, vector<1x8x128xf32>
    %516 = vector.shape_cast %515 : vector<1x8x128xf32> to vector<8x128xf32>
    %517 = arith.mulf %215, %516 : vector<8x128xf32>
    %518 = arith.addf %514, %517 : vector<8x128xf32>
    %c156 = arith.constant 156 : index
    %c0_276 = arith.constant 0 : index
    %c0_277 = arith.constant 0 : index
    %519 = vector.load %arg1[%c156, %c0_276, %c0_277] : memref<200x8x128xf32, #tpu.memory_space<vmem>>, vector<1x8x128xf32>
    %520 = vector.shape_cast %519 : vector<1x8x128xf32> to vector<8x128xf32>
    %521 = arith.addf %518, %520 : vector<8x128xf32>
    %cst_278 = arith.constant 0.000000e+00 : f32
    %522 = vector.broadcast %cst_278 : f32 to vector<8x128xf32>
    %523 = arith.maximumf %521, %522 : vector<8x128xf32>
    %c120 = arith.constant 120 : index
    %c0_279 = arith.constant 0 : index
    %c0_280 = arith.constant 0 : index
    %524 = vector.load %arg1[%c120, %c0_279, %c0_280] : memref<200x8x128xf32, #tpu.memory_space<vmem>>, vector<1x8x128xf32>
    %525 = vector.shape_cast %524 : vector<1x8x128xf32> to vector<8x128xf32>
    %526 = arith.mulf %35, %525 : vector<8x128xf32>
    %c121 = arith.constant 121 : index
    %c0_281 = arith.constant 0 : index
    %c0_282 = arith.constant 0 : index
    %527 = vector.load %arg1[%c121, %c0_281, %c0_282] : memref<200x8x128xf32, #tpu.memory_space<vmem>>, vector<1x8x128xf32>
    %528 = vector.shape_cast %527 : vector<1x8x128xf32> to vector<8x128xf32>
    %529 = arith.mulf %55, %528 : vector<8x128xf32>
    %530 = arith.addf %526, %529 : vector<8x128xf32>
    %c122 = arith.constant 122 : index
    %c0_283 = arith.constant 0 : index
    %c0_284 = arith.constant 0 : index
    %531 = vector.load %arg1[%c122, %c0_283, %c0_284] : memref<200x8x128xf32, #tpu.memory_space<vmem>>, vector<1x8x128xf32>
    %532 = vector.shape_cast %531 : vector<1x8x128xf32> to vector<8x128xf32>
    %533 = arith.mulf %75, %532 : vector<8x128xf32>
    %534 = arith.addf %530, %533 : vector<8x128xf32>
    %c123 = arith.constant 123 : index
    %c0_285 = arith.constant 0 : index
    %c0_286 = arith.constant 0 : index
    %535 = vector.load %arg1[%c123, %c0_285, %c0_286] : memref<200x8x128xf32, #tpu.memory_space<vmem>>, vector<1x8x128xf32>
    %536 = vector.shape_cast %535 : vector<1x8x128xf32> to vector<8x128xf32>
    %537 = arith.mulf %95, %536 : vector<8x128xf32>
    %538 = arith.addf %534, %537 : vector<8x128xf32>
    %c124 = arith.constant 124 : index
    %c0_287 = arith.constant 0 : index
    %c0_288 = arith.constant 0 : index
    %539 = vector.load %arg1[%c124, %c0_287, %c0_288] : memref<200x8x128xf32, #tpu.memory_space<vmem>>, vector<1x8x128xf32>
    %540 = vector.shape_cast %539 : vector<1x8x128xf32> to vector<8x128xf32>
    %541 = arith.mulf %115, %540 : vector<8x128xf32>
    %542 = arith.addf %538, %541 : vector<8x128xf32>
    %c125 = arith.constant 125 : index
    %c0_289 = arith.constant 0 : index
    %c0_290 = arith.constant 0 : index
    %543 = vector.load %arg1[%c125, %c0_289, %c0_290] : memref<200x8x128xf32, #tpu.memory_space<vmem>>, vector<1x8x128xf32>
    %544 = vector.shape_cast %543 : vector<1x8x128xf32> to vector<8x128xf32>
    %545 = arith.mulf %135, %544 : vector<8x128xf32>
    %546 = arith.addf %542, %545 : vector<8x128xf32>
    %c126 = arith.constant 126 : index
    %c0_291 = arith.constant 0 : index
    %c0_292 = arith.constant 0 : index
    %547 = vector.load %arg1[%c126, %c0_291, %c0_292] : memref<200x8x128xf32, #tpu.memory_space<vmem>>, vector<1x8x128xf32>
    %548 = vector.shape_cast %547 : vector<1x8x128xf32> to vector<8x128xf32>
    %549 = arith.mulf %155, %548 : vector<8x128xf32>
    %550 = arith.addf %546, %549 : vector<8x128xf32>
    %c127 = arith.constant 127 : index
    %c0_293 = arith.constant 0 : index
    %c0_294 = arith.constant 0 : index
    %551 = vector.load %arg1[%c127, %c0_293, %c0_294] : memref<200x8x128xf32, #tpu.memory_space<vmem>>, vector<1x8x128xf32>
    %552 = vector.shape_cast %551 : vector<1x8x128xf32> to vector<8x128xf32>
    %553 = arith.mulf %175, %552 : vector<8x128xf32>
    %554 = arith.addf %550, %553 : vector<8x128xf32>
    %c128 = arith.constant 128 : index
    %c0_295 = arith.constant 0 : index
    %c0_296 = arith.constant 0 : index
    %555 = vector.load %arg1[%c128, %c0_295, %c0_296] : memref<200x8x128xf32, #tpu.memory_space<vmem>>, vector<1x8x128xf32>
    %556 = vector.shape_cast %555 : vector<1x8x128xf32> to vector<8x128xf32>
    %557 = arith.mulf %195, %556 : vector<8x128xf32>
    %558 = arith.addf %554, %557 : vector<8x128xf32>
    %c129 = arith.constant 129 : index
    %c0_297 = arith.constant 0 : index
    %c0_298 = arith.constant 0 : index
    %559 = vector.load %arg1[%c129, %c0_297, %c0_298] : memref<200x8x128xf32, #tpu.memory_space<vmem>>, vector<1x8x128xf32>
    %560 = vector.shape_cast %559 : vector<1x8x128xf32> to vector<8x128xf32>
    %561 = arith.mulf %215, %560 : vector<8x128xf32>
    %562 = arith.addf %558, %561 : vector<8x128xf32>
    %c157 = arith.constant 157 : index
    %c0_299 = arith.constant 0 : index
    %c0_300 = arith.constant 0 : index
    %563 = vector.load %arg1[%c157, %c0_299, %c0_300] : memref<200x8x128xf32, #tpu.memory_space<vmem>>, vector<1x8x128xf32>
    %564 = vector.shape_cast %563 : vector<1x8x128xf32> to vector<8x128xf32>
    %565 = arith.addf %562, %564 : vector<8x128xf32>
    %cst_301 = arith.constant 0.000000e+00 : f32
    %566 = vector.broadcast %cst_301 : f32 to vector<8x128xf32>
    %567 = arith.maximumf %565, %566 : vector<8x128xf32>
    %c130 = arith.constant 130 : index
    %c0_302 = arith.constant 0 : index
    %c0_303 = arith.constant 0 : index
    %568 = vector.load %arg1[%c130, %c0_302, %c0_303] : memref<200x8x128xf32, #tpu.memory_space<vmem>>, vector<1x8x128xf32>
    %569 = vector.shape_cast %568 : vector<1x8x128xf32> to vector<8x128xf32>
    %570 = arith.mulf %35, %569 : vector<8x128xf32>
    %c131 = arith.constant 131 : index
    %c0_304 = arith.constant 0 : index
    %c0_305 = arith.constant 0 : index
    %571 = vector.load %arg1[%c131, %c0_304, %c0_305] : memref<200x8x128xf32, #tpu.memory_space<vmem>>, vector<1x8x128xf32>
    %572 = vector.shape_cast %571 : vector<1x8x128xf32> to vector<8x128xf32>
    %573 = arith.mulf %55, %572 : vector<8x128xf32>
    %574 = arith.addf %570, %573 : vector<8x128xf32>
    %c132 = arith.constant 132 : index
    %c0_306 = arith.constant 0 : index
    %c0_307 = arith.constant 0 : index
    %575 = vector.load %arg1[%c132, %c0_306, %c0_307] : memref<200x8x128xf32, #tpu.memory_space<vmem>>, vector<1x8x128xf32>
    %576 = vector.shape_cast %575 : vector<1x8x128xf32> to vector<8x128xf32>
    %577 = arith.mulf %75, %576 : vector<8x128xf32>
    %578 = arith.addf %574, %577 : vector<8x128xf32>
    %c133 = arith.constant 133 : index
    %c0_308 = arith.constant 0 : index
    %c0_309 = arith.constant 0 : index
    %579 = vector.load %arg1[%c133, %c0_308, %c0_309] : memref<200x8x128xf32, #tpu.memory_space<vmem>>, vector<1x8x128xf32>
    %580 = vector.shape_cast %579 : vector<1x8x128xf32> to vector<8x128xf32>
    %581 = arith.mulf %95, %580 : vector<8x128xf32>
    %582 = arith.addf %578, %581 : vector<8x128xf32>
    %c134 = arith.constant 134 : index
    %c0_310 = arith.constant 0 : index
    %c0_311 = arith.constant 0 : index
    %583 = vector.load %arg1[%c134, %c0_310, %c0_311] : memref<200x8x128xf32, #tpu.memory_space<vmem>>, vector<1x8x128xf32>
    %584 = vector.shape_cast %583 : vector<1x8x128xf32> to vector<8x128xf32>
    %585 = arith.mulf %115, %584 : vector<8x128xf32>
    %586 = arith.addf %582, %585 : vector<8x128xf32>
    %c135 = arith.constant 135 : index
    %c0_312 = arith.constant 0 : index
    %c0_313 = arith.constant 0 : index
    %587 = vector.load %arg1[%c135, %c0_312, %c0_313] : memref<200x8x128xf32, #tpu.memory_space<vmem>>, vector<1x8x128xf32>
    %588 = vector.shape_cast %587 : vector<1x8x128xf32> to vector<8x128xf32>
    %589 = arith.mulf %135, %588 : vector<8x128xf32>
    %590 = arith.addf %586, %589 : vector<8x128xf32>
    %c136 = arith.constant 136 : index
    %c0_314 = arith.constant 0 : index
    %c0_315 = arith.constant 0 : index
    %591 = vector.load %arg1[%c136, %c0_314, %c0_315] : memref<200x8x128xf32, #tpu.memory_space<vmem>>, vector<1x8x128xf32>
    %592 = vector.shape_cast %591 : vector<1x8x128xf32> to vector<8x128xf32>
    %593 = arith.mulf %155, %592 : vector<8x128xf32>
    %594 = arith.addf %590, %593 : vector<8x128xf32>
    %c137 = arith.constant 137 : index
    %c0_316 = arith.constant 0 : index
    %c0_317 = arith.constant 0 : index
    %595 = vector.load %arg1[%c137, %c0_316, %c0_317] : memref<200x8x128xf32, #tpu.memory_space<vmem>>, vector<1x8x128xf32>
    %596 = vector.shape_cast %595 : vector<1x8x128xf32> to vector<8x128xf32>
    %597 = arith.mulf %175, %596 : vector<8x128xf32>
    %598 = arith.addf %594, %597 : vector<8x128xf32>
    %c138 = arith.constant 138 : index
    %c0_318 = arith.constant 0 : index
    %c0_319 = arith.constant 0 : index
    %599 = vector.load %arg1[%c138, %c0_318, %c0_319] : memref<200x8x128xf32, #tpu.memory_space<vmem>>, vector<1x8x128xf32>
    %600 = vector.shape_cast %599 : vector<1x8x128xf32> to vector<8x128xf32>
    %601 = arith.mulf %195, %600 : vector<8x128xf32>
    %602 = arith.addf %598, %601 : vector<8x128xf32>
    %c139 = arith.constant 139 : index
    %c0_320 = arith.constant 0 : index
    %c0_321 = arith.constant 0 : index
    %603 = vector.load %arg1[%c139, %c0_320, %c0_321] : memref<200x8x128xf32, #tpu.memory_space<vmem>>, vector<1x8x128xf32>
    %604 = vector.shape_cast %603 : vector<1x8x128xf32> to vector<8x128xf32>
    %605 = arith.mulf %215, %604 : vector<8x128xf32>
    %606 = arith.addf %602, %605 : vector<8x128xf32>
    %c158 = arith.constant 158 : index
    %c0_322 = arith.constant 0 : index
    %c0_323 = arith.constant 0 : index
    %607 = vector.load %arg1[%c158, %c0_322, %c0_323] : memref<200x8x128xf32, #tpu.memory_space<vmem>>, vector<1x8x128xf32>
    %608 = vector.shape_cast %607 : vector<1x8x128xf32> to vector<8x128xf32>
    %609 = arith.addf %606, %608 : vector<8x128xf32>
    %cst_324 = arith.constant 0.000000e+00 : f32
    %610 = vector.broadcast %cst_324 : f32 to vector<8x128xf32>
    %611 = arith.maximumf %609, %610 : vector<8x128xf32>
    %c140 = arith.constant 140 : index
    %c0_325 = arith.constant 0 : index
    %c0_326 = arith.constant 0 : index
    %612 = vector.load %arg1[%c140, %c0_325, %c0_326] : memref<200x8x128xf32, #tpu.memory_space<vmem>>, vector<1x8x128xf32>
    %613 = vector.shape_cast %612 : vector<1x8x128xf32> to vector<8x128xf32>
    %614 = arith.mulf %35, %613 : vector<8x128xf32>
    %c141 = arith.constant 141 : index
    %c0_327 = arith.constant 0 : index
    %c0_328 = arith.constant 0 : index
    %615 = vector.load %arg1[%c141, %c0_327, %c0_328] : memref<200x8x128xf32, #tpu.memory_space<vmem>>, vector<1x8x128xf32>
    %616 = vector.shape_cast %615 : vector<1x8x128xf32> to vector<8x128xf32>
    %617 = arith.mulf %55, %616 : vector<8x128xf32>
    %618 = arith.addf %614, %617 : vector<8x128xf32>
    %c142 = arith.constant 142 : index
    %c0_329 = arith.constant 0 : index
    %c0_330 = arith.constant 0 : index
    %619 = vector.load %arg1[%c142, %c0_329, %c0_330] : memref<200x8x128xf32, #tpu.memory_space<vmem>>, vector<1x8x128xf32>
    %620 = vector.shape_cast %619 : vector<1x8x128xf32> to vector<8x128xf32>
    %621 = arith.mulf %75, %620 : vector<8x128xf32>
    %622 = arith.addf %618, %621 : vector<8x128xf32>
    %c143 = arith.constant 143 : index
    %c0_331 = arith.constant 0 : index
    %c0_332 = arith.constant 0 : index
    %623 = vector.load %arg1[%c143, %c0_331, %c0_332] : memref<200x8x128xf32, #tpu.memory_space<vmem>>, vector<1x8x128xf32>
    %624 = vector.shape_cast %623 : vector<1x8x128xf32> to vector<8x128xf32>
    %625 = arith.mulf %95, %624 : vector<8x128xf32>
    %626 = arith.addf %622, %625 : vector<8x128xf32>
    %c144 = arith.constant 144 : index
    %c0_333 = arith.constant 0 : index
    %c0_334 = arith.constant 0 : index
    %627 = vector.load %arg1[%c144, %c0_333, %c0_334] : memref<200x8x128xf32, #tpu.memory_space<vmem>>, vector<1x8x128xf32>
    %628 = vector.shape_cast %627 : vector<1x8x128xf32> to vector<8x128xf32>
    %629 = arith.mulf %115, %628 : vector<8x128xf32>
    %630 = arith.addf %626, %629 : vector<8x128xf32>
    %c145 = arith.constant 145 : index
    %c0_335 = arith.constant 0 : index
    %c0_336 = arith.constant 0 : index
    %631 = vector.load %arg1[%c145, %c0_335, %c0_336] : memref<200x8x128xf32, #tpu.memory_space<vmem>>, vector<1x8x128xf32>
    %632 = vector.shape_cast %631 : vector<1x8x128xf32> to vector<8x128xf32>
    %633 = arith.mulf %135, %632 : vector<8x128xf32>
    %634 = arith.addf %630, %633 : vector<8x128xf32>
    %c146 = arith.constant 146 : index
    %c0_337 = arith.constant 0 : index
    %c0_338 = arith.constant 0 : index
    %635 = vector.load %arg1[%c146, %c0_337, %c0_338] : memref<200x8x128xf32, #tpu.memory_space<vmem>>, vector<1x8x128xf32>
    %636 = vector.shape_cast %635 : vector<1x8x128xf32> to vector<8x128xf32>
    %637 = arith.mulf %155, %636 : vector<8x128xf32>
    %638 = arith.addf %634, %637 : vector<8x128xf32>
    %c147 = arith.constant 147 : index
    %c0_339 = arith.constant 0 : index
    %c0_340 = arith.constant 0 : index
    %639 = vector.load %arg1[%c147, %c0_339, %c0_340] : memref<200x8x128xf32, #tpu.memory_space<vmem>>, vector<1x8x128xf32>
    %640 = vector.shape_cast %639 : vector<1x8x128xf32> to vector<8x128xf32>
    %641 = arith.mulf %175, %640 : vector<8x128xf32>
    %642 = arith.addf %638, %641 : vector<8x128xf32>
    %c148 = arith.constant 148 : index
    %c0_341 = arith.constant 0 : index
    %c0_342 = arith.constant 0 : index
    %643 = vector.load %arg1[%c148, %c0_341, %c0_342] : memref<200x8x128xf32, #tpu.memory_space<vmem>>, vector<1x8x128xf32>
    %644 = vector.shape_cast %643 : vector<1x8x128xf32> to vector<8x128xf32>
    %645 = arith.mulf %195, %644 : vector<8x128xf32>
    %646 = arith.addf %642, %645 : vector<8x128xf32>
    %c149 = arith.constant 149 : index
    %c0_343 = arith.constant 0 : index
    %c0_344 = arith.constant 0 : index
    %647 = vector.load %arg1[%c149, %c0_343, %c0_344] : memref<200x8x128xf32, #tpu.memory_space<vmem>>, vector<1x8x128xf32>
    %648 = vector.shape_cast %647 : vector<1x8x128xf32> to vector<8x128xf32>
    %649 = arith.mulf %215, %648 : vector<8x128xf32>
    %650 = arith.addf %646, %649 : vector<8x128xf32>
    %c159 = arith.constant 159 : index
    %c0_345 = arith.constant 0 : index
    %c0_346 = arith.constant 0 : index
    %651 = vector.load %arg1[%c159, %c0_345, %c0_346] : memref<200x8x128xf32, #tpu.memory_space<vmem>>, vector<1x8x128xf32>
    %652 = vector.shape_cast %651 : vector<1x8x128xf32> to vector<8x128xf32>
    %653 = arith.addf %650, %652 : vector<8x128xf32>
    %cst_347 = arith.constant 0.000000e+00 : f32
    %654 = vector.broadcast %cst_347 : f32 to vector<8x128xf32>
    %655 = arith.maximumf %653, %654 : vector<8x128xf32>
    %c160 = arith.constant 160 : index
    %c0_348 = arith.constant 0 : index
    %c0_349 = arith.constant 0 : index
    %656 = vector.load %arg1[%c160, %c0_348, %c0_349] : memref<200x8x128xf32, #tpu.memory_space<vmem>>, vector<1x8x128xf32>
    %657 = vector.shape_cast %656 : vector<1x8x128xf32> to vector<8x128xf32>
    %658 = arith.mulf %259, %657 : vector<8x128xf32>
    %c161 = arith.constant 161 : index
    %c0_350 = arith.constant 0 : index
    %c0_351 = arith.constant 0 : index
    %659 = vector.load %arg1[%c161, %c0_350, %c0_351] : memref<200x8x128xf32, #tpu.memory_space<vmem>>, vector<1x8x128xf32>
    %660 = vector.shape_cast %659 : vector<1x8x128xf32> to vector<8x128xf32>
    %661 = arith.mulf %303, %660 : vector<8x128xf32>
    %662 = arith.addf %658, %661 : vector<8x128xf32>
    %c162 = arith.constant 162 : index
    %c0_352 = arith.constant 0 : index
    %c0_353 = arith.constant 0 : index
    %663 = vector.load %arg1[%c162, %c0_352, %c0_353] : memref<200x8x128xf32, #tpu.memory_space<vmem>>, vector<1x8x128xf32>
    %664 = vector.shape_cast %663 : vector<1x8x128xf32> to vector<8x128xf32>
    %665 = arith.mulf %347, %664 : vector<8x128xf32>
    %666 = arith.addf %662, %665 : vector<8x128xf32>
    %c163 = arith.constant 163 : index
    %c0_354 = arith.constant 0 : index
    %c0_355 = arith.constant 0 : index
    %667 = vector.load %arg1[%c163, %c0_354, %c0_355] : memref<200x8x128xf32, #tpu.memory_space<vmem>>, vector<1x8x128xf32>
    %668 = vector.shape_cast %667 : vector<1x8x128xf32> to vector<8x128xf32>
    %669 = arith.mulf %391, %668 : vector<8x128xf32>
    %670 = arith.addf %666, %669 : vector<8x128xf32>
    %c164 = arith.constant 164 : index
    %c0_356 = arith.constant 0 : index
    %c0_357 = arith.constant 0 : index
    %671 = vector.load %arg1[%c164, %c0_356, %c0_357] : memref<200x8x128xf32, #tpu.memory_space<vmem>>, vector<1x8x128xf32>
    %672 = vector.shape_cast %671 : vector<1x8x128xf32> to vector<8x128xf32>
    %673 = arith.mulf %435, %672 : vector<8x128xf32>
    %674 = arith.addf %670, %673 : vector<8x128xf32>
    %c165 = arith.constant 165 : index
    %c0_358 = arith.constant 0 : index
    %c0_359 = arith.constant 0 : index
    %675 = vector.load %arg1[%c165, %c0_358, %c0_359] : memref<200x8x128xf32, #tpu.memory_space<vmem>>, vector<1x8x128xf32>
    %676 = vector.shape_cast %675 : vector<1x8x128xf32> to vector<8x128xf32>
    %677 = arith.mulf %479, %676 : vector<8x128xf32>
    %678 = arith.addf %674, %677 : vector<8x128xf32>
    %c166 = arith.constant 166 : index
    %c0_360 = arith.constant 0 : index
    %c0_361 = arith.constant 0 : index
    %679 = vector.load %arg1[%c166, %c0_360, %c0_361] : memref<200x8x128xf32, #tpu.memory_space<vmem>>, vector<1x8x128xf32>
    %680 = vector.shape_cast %679 : vector<1x8x128xf32> to vector<8x128xf32>
    %681 = arith.mulf %523, %680 : vector<8x128xf32>
    %682 = arith.addf %678, %681 : vector<8x128xf32>
    %c167 = arith.constant 167 : index
    %c0_362 = arith.constant 0 : index
    %c0_363 = arith.constant 0 : index
    %683 = vector.load %arg1[%c167, %c0_362, %c0_363] : memref<200x8x128xf32, #tpu.memory_space<vmem>>, vector<1x8x128xf32>
    %684 = vector.shape_cast %683 : vector<1x8x128xf32> to vector<8x128xf32>
    %685 = arith.mulf %567, %684 : vector<8x128xf32>
    %686 = arith.addf %682, %685 : vector<8x128xf32>
    %c168 = arith.constant 168 : index
    %c0_364 = arith.constant 0 : index
    %c0_365 = arith.constant 0 : index
    %687 = vector.load %arg1[%c168, %c0_364, %c0_365] : memref<200x8x128xf32, #tpu.memory_space<vmem>>, vector<1x8x128xf32>
    %688 = vector.shape_cast %687 : vector<1x8x128xf32> to vector<8x128xf32>
    %689 = arith.mulf %611, %688 : vector<8x128xf32>
    %690 = arith.addf %686, %689 : vector<8x128xf32>
    %c169 = arith.constant 169 : index
    %c0_366 = arith.constant 0 : index
    %c0_367 = arith.constant 0 : index
    %691 = vector.load %arg1[%c169, %c0_366, %c0_367] : memref<200x8x128xf32, #tpu.memory_space<vmem>>, vector<1x8x128xf32>
    %692 = vector.shape_cast %691 : vector<1x8x128xf32> to vector<8x128xf32>
    %693 = arith.mulf %655, %692 : vector<8x128xf32>
    %694 = arith.addf %690, %693 : vector<8x128xf32>
    %c190 = arith.constant 190 : index
    %c0_368 = arith.constant 0 : index
    %c0_369 = arith.constant 0 : index
    %695 = vector.load %arg1[%c190, %c0_368, %c0_369] : memref<200x8x128xf32, #tpu.memory_space<vmem>>, vector<1x8x128xf32>
    %696 = vector.shape_cast %695 : vector<1x8x128xf32> to vector<8x128xf32>
    %697 = arith.addf %694, %696 : vector<8x128xf32>
    %c170 = arith.constant 170 : index
    %c0_370 = arith.constant 0 : index
    %c0_371 = arith.constant 0 : index
    %698 = vector.load %arg1[%c170, %c0_370, %c0_371] : memref<200x8x128xf32, #tpu.memory_space<vmem>>, vector<1x8x128xf32>
    %699 = vector.shape_cast %698 : vector<1x8x128xf32> to vector<8x128xf32>
    %700 = arith.mulf %259, %699 : vector<8x128xf32>
    %c171 = arith.constant 171 : index
    %c0_372 = arith.constant 0 : index
    %c0_373 = arith.constant 0 : index
    %701 = vector.load %arg1[%c171, %c0_372, %c0_373] : memref<200x8x128xf32, #tpu.memory_space<vmem>>, vector<1x8x128xf32>
    %702 = vector.shape_cast %701 : vector<1x8x128xf32> to vector<8x128xf32>
    %703 = arith.mulf %303, %702 : vector<8x128xf32>
    %704 = arith.addf %700, %703 : vector<8x128xf32>
    %c172 = arith.constant 172 : index
    %c0_374 = arith.constant 0 : index
    %c0_375 = arith.constant 0 : index
    %705 = vector.load %arg1[%c172, %c0_374, %c0_375] : memref<200x8x128xf32, #tpu.memory_space<vmem>>, vector<1x8x128xf32>
    %706 = vector.shape_cast %705 : vector<1x8x128xf32> to vector<8x128xf32>
    %707 = arith.mulf %347, %706 : vector<8x128xf32>
    %708 = arith.addf %704, %707 : vector<8x128xf32>
    %c173 = arith.constant 173 : index
    %c0_376 = arith.constant 0 : index
    %c0_377 = arith.constant 0 : index
    %709 = vector.load %arg1[%c173, %c0_376, %c0_377] : memref<200x8x128xf32, #tpu.memory_space<vmem>>, vector<1x8x128xf32>
    %710 = vector.shape_cast %709 : vector<1x8x128xf32> to vector<8x128xf32>
    %711 = arith.mulf %391, %710 : vector<8x128xf32>
    %712 = arith.addf %708, %711 : vector<8x128xf32>
    %c174 = arith.constant 174 : index
    %c0_378 = arith.constant 0 : index
    %c0_379 = arith.constant 0 : index
    %713 = vector.load %arg1[%c174, %c0_378, %c0_379] : memref<200x8x128xf32, #tpu.memory_space<vmem>>, vector<1x8x128xf32>
    %714 = vector.shape_cast %713 : vector<1x8x128xf32> to vector<8x128xf32>
    %715 = arith.mulf %435, %714 : vector<8x128xf32>
    %716 = arith.addf %712, %715 : vector<8x128xf32>
    %c175 = arith.constant 175 : index
    %c0_380 = arith.constant 0 : index
    %c0_381 = arith.constant 0 : index
    %717 = vector.load %arg1[%c175, %c0_380, %c0_381] : memref<200x8x128xf32, #tpu.memory_space<vmem>>, vector<1x8x128xf32>
    %718 = vector.shape_cast %717 : vector<1x8x128xf32> to vector<8x128xf32>
    %719 = arith.mulf %479, %718 : vector<8x128xf32>
    %720 = arith.addf %716, %719 : vector<8x128xf32>
    %c176 = arith.constant 176 : index
    %c0_382 = arith.constant 0 : index
    %c0_383 = arith.constant 0 : index
    %721 = vector.load %arg1[%c176, %c0_382, %c0_383] : memref<200x8x128xf32, #tpu.memory_space<vmem>>, vector<1x8x128xf32>
    %722 = vector.shape_cast %721 : vector<1x8x128xf32> to vector<8x128xf32>
    %723 = arith.mulf %523, %722 : vector<8x128xf32>
    %724 = arith.addf %720, %723 : vector<8x128xf32>
    %c177 = arith.constant 177 : index
    %c0_384 = arith.constant 0 : index
    %c0_385 = arith.constant 0 : index
    %725 = vector.load %arg1[%c177, %c0_384, %c0_385] : memref<200x8x128xf32, #tpu.memory_space<vmem>>, vector<1x8x128xf32>
    %726 = vector.shape_cast %725 : vector<1x8x128xf32> to vector<8x128xf32>
    %727 = arith.mulf %567, %726 : vector<8x128xf32>
    %728 = arith.addf %724, %727 : vector<8x128xf32>
    %c178 = arith.constant 178 : index
    %c0_386 = arith.constant 0 : index
    %c0_387 = arith.constant 0 : index
    %729 = vector.load %arg1[%c178, %c0_386, %c0_387] : memref<200x8x128xf32, #tpu.memory_space<vmem>>, vector<1x8x128xf32>
    %730 = vector.shape_cast %729 : vector<1x8x128xf32> to vector<8x128xf32>
    %731 = arith.mulf %611, %730 : vector<8x128xf32>
    %732 = arith.addf %728, %731 : vector<8x128xf32>
    %c179 = arith.constant 179 : index
    %c0_388 = arith.constant 0 : index
    %c0_389 = arith.constant 0 : index
    %733 = vector.load %arg1[%c179, %c0_388, %c0_389] : memref<200x8x128xf32, #tpu.memory_space<vmem>>, vector<1x8x128xf32>
    %734 = vector.shape_cast %733 : vector<1x8x128xf32> to vector<8x128xf32>
    %735 = arith.mulf %655, %734 : vector<8x128xf32>
    %736 = arith.addf %732, %735 : vector<8x128xf32>
    %c191 = arith.constant 191 : index
    %c0_390 = arith.constant 0 : index
    %c0_391 = arith.constant 0 : index
    %737 = vector.load %arg1[%c191, %c0_390, %c0_391] : memref<200x8x128xf32, #tpu.memory_space<vmem>>, vector<1x8x128xf32>
    %738 = vector.shape_cast %737 : vector<1x8x128xf32> to vector<8x128xf32>
    %739 = arith.addf %736, %738 : vector<8x128xf32>
    %c180 = arith.constant 180 : index
    %c0_392 = arith.constant 0 : index
    %c0_393 = arith.constant 0 : index
    %740 = vector.load %arg1[%c180, %c0_392, %c0_393] : memref<200x8x128xf32, #tpu.memory_space<vmem>>, vector<1x8x128xf32>
    %741 = vector.shape_cast %740 : vector<1x8x128xf32> to vector<8x128xf32>
    %742 = arith.mulf %259, %741 : vector<8x128xf32>
    %c181 = arith.constant 181 : index
    %c0_394 = arith.constant 0 : index
    %c0_395 = arith.constant 0 : index
    %743 = vector.load %arg1[%c181, %c0_394, %c0_395] : memref<200x8x128xf32, #tpu.memory_space<vmem>>, vector<1x8x128xf32>
    %744 = vector.shape_cast %743 : vector<1x8x128xf32> to vector<8x128xf32>
    %745 = arith.mulf %303, %744 : vector<8x128xf32>
    %746 = arith.addf %742, %745 : vector<8x128xf32>
    %c182 = arith.constant 182 : index
    %c0_396 = arith.constant 0 : index
    %c0_397 = arith.constant 0 : index
    %747 = vector.load %arg1[%c182, %c0_396, %c0_397] : memref<200x8x128xf32, #tpu.memory_space<vmem>>, vector<1x8x128xf32>
    %748 = vector.shape_cast %747 : vector<1x8x128xf32> to vector<8x128xf32>
    %749 = arith.mulf %347, %748 : vector<8x128xf32>
    %750 = arith.addf %746, %749 : vector<8x128xf32>
    %c183 = arith.constant 183 : index
    %c0_398 = arith.constant 0 : index
    %c0_399 = arith.constant 0 : index
    %751 = vector.load %arg1[%c183, %c0_398, %c0_399] : memref<200x8x128xf32, #tpu.memory_space<vmem>>, vector<1x8x128xf32>
    %752 = vector.shape_cast %751 : vector<1x8x128xf32> to vector<8x128xf32>
    %753 = arith.mulf %391, %752 : vector<8x128xf32>
    %754 = arith.addf %750, %753 : vector<8x128xf32>
    %c184 = arith.constant 184 : index
    %c0_400 = arith.constant 0 : index
    %c0_401 = arith.constant 0 : index
    %755 = vector.load %arg1[%c184, %c0_400, %c0_401] : memref<200x8x128xf32, #tpu.memory_space<vmem>>, vector<1x8x128xf32>
    %756 = vector.shape_cast %755 : vector<1x8x128xf32> to vector<8x128xf32>
    %757 = arith.mulf %435, %756 : vector<8x128xf32>
    %758 = arith.addf %754, %757 : vector<8x128xf32>
    %c185 = arith.constant 185 : index
    %c0_402 = arith.constant 0 : index
    %c0_403 = arith.constant 0 : index
    %759 = vector.load %arg1[%c185, %c0_402, %c0_403] : memref<200x8x128xf32, #tpu.memory_space<vmem>>, vector<1x8x128xf32>
    %760 = vector.shape_cast %759 : vector<1x8x128xf32> to vector<8x128xf32>
    %761 = arith.mulf %479, %760 : vector<8x128xf32>
    %762 = arith.addf %758, %761 : vector<8x128xf32>
    %c186 = arith.constant 186 : index
    %c0_404 = arith.constant 0 : index
    %c0_405 = arith.constant 0 : index
    %763 = vector.load %arg1[%c186, %c0_404, %c0_405] : memref<200x8x128xf32, #tpu.memory_space<vmem>>, vector<1x8x128xf32>
    %764 = vector.shape_cast %763 : vector<1x8x128xf32> to vector<8x128xf32>
    %765 = arith.mulf %523, %764 : vector<8x128xf32>
    %766 = arith.addf %762, %765 : vector<8x128xf32>
    %c187 = arith.constant 187 : index
    %c0_406 = arith.constant 0 : index
    %c0_407 = arith.constant 0 : index
    %767 = vector.load %arg1[%c187, %c0_406, %c0_407] : memref<200x8x128xf32, #tpu.memory_space<vmem>>, vector<1x8x128xf32>
    %768 = vector.shape_cast %767 : vector<1x8x128xf32> to vector<8x128xf32>
    %769 = arith.mulf %567, %768 : vector<8x128xf32>
    %770 = arith.addf %766, %769 : vector<8x128xf32>
    %c188 = arith.constant 188 : index
    %c0_408 = arith.constant 0 : index
    %c0_409 = arith.constant 0 : index
    %771 = vector.load %arg1[%c188, %c0_408, %c0_409] : memref<200x8x128xf32, #tpu.memory_space<vmem>>, vector<1x8x128xf32>
    %772 = vector.shape_cast %771 : vector<1x8x128xf32> to vector<8x128xf32>
    %773 = arith.mulf %611, %772 : vector<8x128xf32>
    %774 = arith.addf %770, %773 : vector<8x128xf32>
    %c189 = arith.constant 189 : index
    %c0_410 = arith.constant 0 : index
    %c0_411 = arith.constant 0 : index
    %775 = vector.load %arg1[%c189, %c0_410, %c0_411] : memref<200x8x128xf32, #tpu.memory_space<vmem>>, vector<1x8x128xf32>
    %776 = vector.shape_cast %775 : vector<1x8x128xf32> to vector<8x128xf32>
    %777 = arith.mulf %655, %776 : vector<8x128xf32>
    %778 = arith.addf %774, %777 : vector<8x128xf32>
    %c192 = arith.constant 192 : index
    %c0_412 = arith.constant 0 : index
    %c0_413 = arith.constant 0 : index
    %779 = vector.load %arg1[%c192, %c0_412, %c0_413] : memref<200x8x128xf32, #tpu.memory_space<vmem>>, vector<1x8x128xf32>
    %780 = vector.shape_cast %779 : vector<1x8x128xf32> to vector<8x128xf32>
    %781 = arith.addf %778, %780 : vector<8x128xf32>
    %782 = arith.maximumf %739, %781 : vector<8x128xf32>
    %783 = arith.maximumf %697, %782 : vector<8x128xf32>
    %784 = arith.subf %697, %783 : vector<8x128xf32>
    %785 = math.exp %784 : vector<8x128xf32>
    %786 = arith.subf %739, %783 : vector<8x128xf32>
    %787 = math.exp %786 : vector<8x128xf32>
    %788 = arith.subf %781, %783 : vector<8x128xf32>
    %789 = math.exp %788 : vector<8x128xf32>
    %790 = arith.addf %785, %787 : vector<8x128xf32>
    %791 = arith.addf %790, %789 : vector<8x128xf32>
    %792 = math.log %791 : vector<8x128xf32>
    %793 = arith.addf %783, %792 : vector<8x128xf32>
    %794 = arith.subf %697, %793 : vector<8x128xf32>
    %c0_414 = arith.constant 0 : index
    %795 = arith.index_cast %3 : i32 to index
    %c0_415 = arith.constant 0 : index
    %796 = vector.load %arg3[%c0_414, %795, %c0_415] : memref<3x8x128xf32, #tpu.memory_space<vmem>>, vector<1x8x128xf32>
    %797 = vector.shape_cast %796 : vector<1x8x128xf32> to vector<8x128xf32>
    %798 = vector.shape_cast %794 : vector<8x128xf32> to vector<1x8x128xf32>
    tpu.vector_store %arg3[%c0_414, %795, %c0_415], %798 {strides = array<i32>} : memref<3x8x128xf32, #tpu.memory_space<vmem>>, vector<1x8x128xf32>,
    %799 = arith.subf %739, %793 : vector<8x128xf32>
    %c1_416 = arith.constant 1 : index
    %800 = arith.index_cast %3 : i32 to index
    %c0_417 = arith.constant 0 : index
    %801 = vector.load %arg3[%c1_416, %800, %c0_417] : memref<3x8x128xf32, #tpu.memory_space<vmem>>, vector<1x8x128xf32>
    %802 = vector.shape_cast %801 : vector<1x8x128xf32> to vector<8x128xf32>
    %803 = vector.shape_cast %799 : vector<8x128xf32> to vector<1x8x128xf32>
    tpu.vector_store %arg3[%c1_416, %800, %c0_417], %803 {strides = array<i32>} : memref<3x8x128xf32, #tpu.memory_space<vmem>>, vector<1x8x128xf32>,
    %804 = arith.subf %781, %793 : vector<8x128xf32>
    %c2_418 = arith.constant 2 : index
    %805 = arith.index_cast %3 : i32 to index
    %c0_419 = arith.constant 0 : index
    %806 = vector.load %arg3[%c2_418, %805, %c0_419] : memref<3x8x128xf32, #tpu.memory_space<vmem>>, vector<1x8x128xf32>
    %807 = vector.shape_cast %806 : vector<1x8x128xf32> to vector<8x128xf32>
    %808 = vector.shape_cast %804 : vector<8x128xf32> to vector<1x8x128xf32>
    tpu.vector_store %arg3[%c2_418, %805, %c0_419], %808 {strides = array<i32>} : memref<3x8x128xf32, #tpu.memory_space<vmem>>, vector<1x8x128xf32>,
    %c1_i32_420 = arith.constant 1 : i32
    return
  }
  func.func @transform_0(%arg0: i32) -> (i32, i32, i32) {
    %c0_i32 = arith.constant 0 : i32
    %c0_i32_0 = arith.constant 0 : i32
    %c0_i32_1 = arith.constant 0 : i32
    %c0_i32_2 = arith.constant 0 : i32
    return %c0_i32, %c0_i32_0, %c0_i32_1 : i32, i32, i32
  }
  func.func @transform_1(%arg0: i32) -> (i32, i32, i32) {
    %c0_i32 = arith.constant 0 : i32
    %c0_i32_0 = arith.constant 0 : i32
    %c0_i32_1 = arith.constant 0 : i32
    return %c0_i32, %arg0, %c0_i32_0 : i32, i32, i32
  }
  func.func @transform_2(%arg0: i32) -> (i32, i32, i32) {
    %c0_i32 = arith.constant 0 : i32
    %c0_i32_0 = arith.constant 0 : i32
    %c0_i32_1 = arith.constant 0 : i32
    return %c0_i32, %arg0, %c0_i32_0 : i32, i32, i32
  }
}

</mosaic_0001>

<llo_original>
// kernel: net_forward.1
$region0: #{net_forward.1}
  #allocation0 [shape = 'u32[]', space=smem, size = 0x4, offset = 0x4, fixed_abs, tag = 'smem constant byte address 0x4 - core index']
  #allocation1 [shape = 'u32[144,128]{1,0:T(1,128)}', space=vmem, size = 0x12000, scoped, tag = 'internal scratch']
  %s0 = inlined_call_operand.vmem [shape: f32[200,8,128], index: 0, kind: input, shape index: {}]
  %s1 = inlined_call_operand.vmem [shape: f32[4,8,128], index: 1, kind: input, shape index: {}]
  %s2 = inlined_call_operand.vmem [shape: f32[3,8,128], index: 2, kind: output, shape index: {}]
  %s3 = sld [smem:[#allocation0]]
  $region18: #{net_forward.1} parent=0
    _
  %s5 = ssub.s32 1, %s3
  %s6 = scalar_select 0, %s5, %s3
  // Predicated region
  $region2: #{net_forward.1} parent=0 // pred_check
    _
  $region3: #{net_forward.1} parent=0 // pred_check_branch
    %8 = sbr.rel (0) target = $region5
  $region4: #{net_forward.1} parent=0 // pred_region
    _
  $region5: #{net_forward.1} parent=0 // pred_fallthru
    _
  // Predicated region
  $region6: #{net_forward.1} parent=0 // pred_check
    _
  $region7: #{net_forward.1} parent=0 // pred_check_branch
    %10 = sbr.rel (0) target = $region9
  $region8: #{net_forward.1} parent=0 // pred_region
    _
  $region9: #{net_forward.1} parent=0 // pred_fallthru
    _
  %v11 = vld [vmem:[%s1] sm:$0xff]
  %s12 = sadd.s32 0, 8
  %s13 = scalar_lea.vmem %s1, %s12
  %v14 = vld [vmem:[%s13] sm:$0xff]
  %s15 = sadd.s32 0, 16
  %s16 = scalar_lea.vmem %s1, %s15
  %v17 = vld [vmem:[%s16] sm:$0xff]
  %s18 = sadd.s32 0, 24
  %s19 = scalar_lea.vmem %s1, %s18
  %v20 = vld [vmem:[%s19] sm:$0xff]
  %v21 = vld [vmem:[%s0] sm:$0xff]
  %v22 = vmul.f32 %v11, %v21
  %s23 = scalar_lea.vmem %s0, 8
  %v24 = vld [vmem:[%s23] sm:$0xff]
  %v25 = vmul.f32 %v14, %v24
  %v26 = vadd.f32 %v22, %v25
  %s27 = scalar_lea.vmem %s0, 16
  %v28 = vld [vmem:[%s27] sm:$0xff]
  %v29 = vmul.f32 %v17, %v28
  %v30 = vadd.f32 %v26, %v29
  %s31 = scalar_lea.vmem %s0, 24
  %v32 = vld [vmem:[%s31] sm:$0xff]
  %v33 = vmul.f32 %v20, %v32
  %v34 = vadd.f32 %v30, %v33
  %s35 = scalar_lea.vmem %s0, 320
  %v36 = vld [vmem:[%s35] sm:$0xff]
  %v37 = vadd.f32 %v34, %v36
  %v38 = vmax.f32 %v37, 0.0
  %s39 = scalar_lea.vmem %s0, 32
  %v40 = vld [vmem:[%s39] sm:$0xff]
  %v41 = vmul.f32 %v11, %v40
  %s42 = scalar_lea.vmem %s0, 40
  %v43 = vld [vmem:[%s42] sm:$0xff]
  %v44 = vmul.f32 %v14, %v43
  %v45 = vadd.f32 %v41, %v44
  %s46 = scalar_lea.vmem %s0, 48
  %v47 = vld [vmem:[%s46] sm:$0xff]
  %v48 = vmul.f32 %v17, %v47
  %v49 = vadd.f32 %v45, %v48
  %s50 = scalar_lea.vmem %s0, 56
  %v51 = vld [vmem:[%s50] sm:$0xff]
  %v52 = vmul.f32 %v20, %v51
  %v53 = vadd.f32 %v49, %v52
  %s54 = scalar_lea.vmem %s0, 328
  %v55 = vld [vmem:[%s54] sm:$0xff]
  %v56 = vadd.f32 %v53, %v55
  %v57 = vmax.f32 %v56, 0.0
  %s58 = scalar_lea.vmem %s0, 64
  %v59 = vld [vmem:[%s58] sm:$0xff]
  %v60 = vmul.f32 %v11, %v59
  %s61 = scalar_lea.vmem %s0, 72
  %v62 = vld [vmem:[%s61] sm:$0xff]
  %v63 = vmul.f32 %v14, %v62
  %v64 = vadd.f32 %v60, %v63
  %s65 = scalar_lea.vmem %s0, 80
  %v66 = vld [vmem:[%s65] sm:$0xff]
  %v67 = vmul.f32 %v17, %v66
  %v68 = vadd.f32 %v64, %v67
  %s69 = scalar_lea.vmem %s0, 88
  %v70 = vld [vmem:[%s69] sm:$0xff]
  %v71 = vmul.f32 %v20, %v70
  %v72 = vadd.f32 %v68, %v71
  %s73 = scalar_lea.vmem %s0, 336
  %v74 = vld [vmem:[%s73] sm:$0xff]
  %v75 = vadd.f32 %v72, %v74
  %v76 = vmax.f32 %v75, 0.0
  %s77 = scalar_lea.vmem %s0, 96
  %v78 = vld [vmem:[%s77] sm:$0xff]
  %v79 = vmul.f32 %v11, %v78
  %s80 = scalar_lea.vmem %s0, 104
  %v81 = vld [vmem:[%s80] sm:$0xff]
  %v82 = vmul.f32 %v14, %v81
  %v83 = vadd.f32 %v79, %v82
  %s84 = scalar_lea.vmem %s0, 112
  %v85 = vld [vmem:[%s84] sm:$0xff]
  %v86 = vmul.f32 %v17, %v85
  %v87 = vadd.f32 %v83, %v86
  %s88 = scalar_lea.vmem %s0, 120
  %v89 = vld [vmem:[%s88] sm:$0xff]
  %v90 = vmul.f32 %v20, %v89
  %v91 = vadd.f32 %v87, %v90
  %s92 = scalar_lea.vmem %s0, 344
  %v93 = vld [vmem:[%s92] sm:$0xff]
  %v94 = vadd.f32 %v91, %v93
  %v95 = vmax.f32 %v94, 0.0
  %s96 = scalar_lea.vmem %s0, 128
  %v97 = vld [vmem:[%s96] sm:$0xff]
  %v98 = vmul.f32 %v11, %v97
  %s99 = scalar_lea.vmem %s0, 136
  %v100 = vld [vmem:[%s99] sm:$0xff]
  %v101 = vmul.f32 %v14, %v100
  %v102 = vadd.f32 %v98, %v101
  %s103 = scalar_lea.vmem %s0, 144
  %v104 = vld [vmem:[%s103] sm:$0xff]
  %v105 = vmul.f32 %v17, %v104
  %v106 = vadd.f32 %v102, %v105
  %s107 = scalar_lea.vmem %s0, 152
  %v108 = vld [vmem:[%s107] sm:$0xff]
  %v109 = vmul.f32 %v20, %v108
  %v110 = vadd.f32 %v106, %v109
  %s111 = scalar_lea.vmem %s0, 352
  %v112 = vld [vmem:[%s111] sm:$0xff]
  %v113 = vadd.f32 %v110, %v112
  %v114 = vmax.f32 %v113, 0.0
  %s115 = scalar_lea.vmem %s0, 160
  %v116 = vld [vmem:[%s115] sm:$0xff]
  %v117 = vmul.f32 %v11, %v116
  %s118 = scalar_lea.vmem %s0, 168
  %v119 = vld [vmem:[%s118] sm:$0xff]
  %v120 = vmul.f32 %v14, %v119
  %v121 = vadd.f32 %v117, %v120
  %s122 = scalar_lea.vmem %s0, 176
  %v123 = vld [vmem:[%s122] sm:$0xff]
  %v124 = vmul.f32 %v17, %v123
  %v125 = vadd.f32 %v121, %v124
  %s126 = scalar_lea.vmem %s0, 184
  %v127 = vld [vmem:[%s126] sm:$0xff]
  %v128 = vmul.f32 %v20, %v127
  %v129 = vadd.f32 %v125, %v128
  %s130 = scalar_lea.vmem %s0, 360
  %v131 = vld [vmem:[%s130] sm:$0xff]
  %v132 = vadd.f32 %v129, %v131
  %v133 = vmax.f32 %v132, 0.0
  %s134 = scalar_lea.vmem %s0, 192
  %v135 = vld [vmem:[%s134] sm:$0xff]
  %v136 = vmul.f32 %v11, %v135
  %s137 = scalar_lea.vmem %s0, 200
  %v138 = vld [vmem:[%s137] sm:$0xff]
  %v139 = vmul.f32 %v14, %v138
  %v140 = vadd.f32 %v136, %v139
  %s141 = scalar_lea.vmem %s0, 208
  %v142 = vld [vmem:[%s141] sm:$0xff]
  %v143 = vmul.f32 %v17, %v142
  %v144 = vadd.f32 %v140, %v143
  %s145 = scalar_lea.vmem %s0, 216
  %v146 = vld [vmem:[%s145] sm:$0xff]
  %v147 = vmul.f32 %v20, %v146
  %v148 = vadd.f32 %v144, %v147
  %s149 = scalar_lea.vmem %s0, 368
  %v150 = vld [vmem:[%s149] sm:$0xff]
  %v151 = vadd.f32 %v148, %v150
  %v152 = vmax.f32 %v151, 0.0
  %s153 = scalar_lea.vmem %s0, 224
  %v154 = vld [vmem:[%s153] sm:$0xff]
  %v155 = vmul.f32 %v11, %v154
  %s156 = scalar_lea.vmem %s0, 232
  %v157 = vld [vmem:[%s156] sm:$0xff]
  %v158 = vmul.f32 %v14, %v157
  %v159 = vadd.f32 %v155, %v158
  %s160 = scalar_lea.vmem %s0, 240
  %v161 = vld [vmem:[%s160] sm:$0xff]
  %v162 = vmul.f32 %v17, %v161
  %v163 = vadd.f32 %v159, %v162
  %s164 = scalar_lea.vmem %s0, 248
  %v165 = vld [vmem:[%s164] sm:$0xff]
  %v166 = vmul.f32 %v20, %v165
  %v167 = vadd.f32 %v163, %v166
  %s168 = scalar_lea.vmem %s0, 376
  %v169 = vld [vmem:[%s168] sm:$0xff]
  %v170 = vadd.f32 %v167, %v169
  %v171 = vmax.f32 %v170, 0.0
  %s172 = scalar_lea.vmem %s0, 256
  %v173 = vld [vmem:[%s172] sm:$0xff]
  %v174 = vmul.f32 %v11, %v173
  %s175 = scalar_lea.vmem %s0, 264
  %v176 = vld [vmem:[%s175] sm:$0xff]
  %v177 = vmul.f32 %v14, %v176
  %v178 = vadd.f32 %v174, %v177
  %s179 = scalar_lea.vmem %s0, 272
  %v180 = vld [vmem:[%s179] sm:$0xff]
  %v181 = vmul.f32 %v17, %v180
  %v182 = vadd.f32 %v178, %v181
  %s183 = scalar_lea.vmem %s0, 280
  %v184 = vld [vmem:[%s183] sm:$0xff]
  %v185 = vmul.f32 %v20, %v184
  %v186 = vadd.f32 %v182, %v185
  %s187 = scalar_lea.vmem %s0, 384
  %v188 = vld [vmem:[%s187] sm:$0xff]
  %v189 = vadd.f32 %v186, %v188
  %v190 = vmax.f32 %v189, 0.0
  %s191 = scalar_lea.vmem %s0, 288
  %v192 = vld [vmem:[%s191] sm:$0xff]
  %v193 = vmul.f32 %v11, %v192
  %s194 = scalar_lea.vmem %s0, 296
  %v195 = vld [vmem:[%s194] sm:$0xff]
  %v196 = vmul.f32 %v14, %v195
  %v197 = vadd.f32 %v193, %v196
  %s198 = scalar_lea.vmem %s0, 304
  %v199 = vld [vmem:[%s198] sm:$0xff]
  %v200 = vmul.f32 %v17, %v199
  %v201 = vadd.f32 %v197, %v200
  %s202 = scalar_lea.vmem %s0, 312
  %v203 = vld [vmem:[%s202] sm:$0xff]
  %v204 = vmul.f32 %v20, %v203
  %v205 = vadd.f32 %v201, %v204
  %s206 = scalar_lea.vmem %s0, 392
  %v207 = vld [vmem:[%s206] sm:$0xff]
  %v208 = vadd.f32 %v205, %v207
  %v209 = vmax.f32 %v208, 0.0
  %s210 = scalar_lea.vmem %s0, 400
  %v211 = vld [vmem:[%s210] sm:$0xff]
  %v212 = vmul.f32 %v38, %v211
  %s213 = scalar_lea.vmem %s0, 408
  %v214 = vld [vmem:[%s213] sm:$0xff]
  %v215 = vmul.f32 %v57, %v214
  %v216 = vadd.f32 %v212, %v215
  %s217 = scalar_lea.vmem %s0, 416
  %v218 = vld [vmem:[%s217] sm:$0xff]
  %v219 = vmul.f32 %v76, %v218
  %v220 = vadd.f32 %v216, %v219
  %s221 = scalar_lea.vmem %s0, 424
  %v222 = vld [vmem:[%s221] sm:$0xff]
  %v223 = vmul.f32 %v95, %v222
  %v224 = vadd.f32 %v220, %v223
  %s225 = scalar_lea.vmem %s0, 432
  %v226 = vld [vmem:[%s225] sm:$0xff]
  %v227 = vmul.f32 %v114, %v226
  %v228 = vadd.f32 %v224, %v227
  %s229 = scalar_lea.vmem %s0, 440
  %v230 = vld [vmem:[%s229] sm:$0xff]
  %v231 = vmul.f32 %v133, %v230
  %v232 = vadd.f32 %v228, %v231
  %s233 = scalar_lea.vmem %s0, 448
  %v234 = vld [vmem:[%s233] sm:$0xff]
  %v235 = vmul.f32 %v152, %v234
  %v236 = vadd.f32 %v232, %v235
  %s237 = scalar_lea.vmem %s0, 456
  %v238 = vld [vmem:[%s237] sm:$0xff]
  %v239 = vmul.f32 %v171, %v238
  %v240 = vadd.f32 %v236, %v239
  %s241 = scalar_lea.vmem %s0, 464
  %v242 = vld [vmem:[%s241] sm:$0xff]
  %v243 = vmul.f32 %v190, %v242
  %v244 = vadd.f32 %v240, %v243
  %s245 = scalar_lea.vmem %s0, 472
  %v246 = vld [vmem:[%s245] sm:$0xff]
  %v247 = vmul.f32 %v209, %v246
  %v248 = vadd.f32 %v244, %v247
  %s249 = scalar_lea.vmem %s0, 1200
  %v250 = vld [vmem:[%s249] sm:$0xff]
  %v251 = vadd.f32 %v248, %v250
  %v252 = vmax.f32 %v251, 0.0
  %s253 = scalar_lea.vmem %s0, 480
  %v254 = vld [vmem:[%s253] sm:$0xff]
  %v255 = vmul.f32 %v38, %v254
  %s256 = scalar_lea.vmem %s0, 488
  %v257 = vld [vmem:[%s256] sm:$0xff]
  %v258 = vmul.f32 %v57, %v257
  %v259 = vadd.f32 %v255, %v258
  %s260 = scalar_lea.vmem %s0, 496
  %v261 = vld [vmem:[%s260] sm:$0xff]
  %v262 = vmul.f32 %v76, %v261
  %v263 = vadd.f32 %v259, %v262
  %s264 = scalar_lea.vmem %s0, 504
  %v265 = vld [vmem:[%s264] sm:$0xff]
  %v266 = vmul.f32 %v95, %v265
  %v267 = vadd.f32 %v263, %v266
  %s268 = scalar_lea.vmem %s0, 512
  %v269 = vld [vmem:[%s268] sm:$0xff]
  %v270 = vmul.f32 %v114, %v269
  %v271 = vadd.f32 %v267, %v270
  %s272 = scalar_lea.vmem %s0, 520
  %v273 = vld [vmem:[%s272] sm:$0xff]
  %v274 = vmul.f32 %v133, %v273
  %v275 = vadd.f32 %v271, %v274
  %s276 = scalar_lea.vmem %s0, 528
  %v277 = vld [vmem:[%s276] sm:$0xff]
  %v278 = vmul.f32 %v152, %v277
  %v279 = vadd.f32 %v275, %v278
  %s280 = scalar_lea.vmem %s0, 536
  %v281 = vld [vmem:[%s280] sm:$0xff]
  %v282 = vmul.f32 %v171, %v281
  %v283 = vadd.f32 %v279, %v282
  %s284 = scalar_lea.vmem %s0, 544
  %v285 = vld [vmem:[%s284] sm:$0xff]
  %v286 = vmul.f32 %v190, %v285
  %v287 = vadd.f32 %v283, %v286
  %s288 = scalar_lea.vmem %s0, 552
  %v289 = vld [vmem:[%s288] sm:$0xff]
  %v290 = vmul.f32 %v209, %v289
  %v291 = vadd.f32 %v287, %v290
  %s292 = scalar_lea.vmem %s0, 1208
  %v293 = vld [vmem:[%s292] sm:$0xff]
  %v294 = vadd.f32 %v291, %v293
  %v295 = vmax.f32 %v294, 0.0
  %s296 = scalar_lea.vmem %s0, 560
  %v297 = vld [vmem:[%s296] sm:$0xff]
  %v298 = vmul.f32 %v38, %v297
  %s299 = scalar_lea.vmem %s0, 568
  %v300 = vld [vmem:[%s299] sm:$0xff]
  %v301 = vmul.f32 %v57, %v300
  %v302 = vadd.f32 %v298, %v301
  %s303 = scalar_lea.vmem %s0, 576
  %v304 = vld [vmem:[%s303] sm:$0xff]
  %v305 = vmul.f32 %v76, %v304
  %v306 = vadd.f32 %v302, %v305
  %s307 = scalar_lea.vmem %s0, 584
  %v308 = vld [vmem:[%s307] sm:$0xff]
  %v309 = vmul.f32 %v95, %v308
  %v310 = vadd.f32 %v306, %v309
  %s311 = scalar_lea.vmem %s0, 592
  %v312 = vld [vmem:[%s311] sm:$0xff]
  %v313 = vmul.f32 %v114, %v312
  %v314 = vadd.f32 %v310, %v313
  %s315 = scalar_lea.vmem %s0, 600
  %v316 = vld [vmem:[%s315] sm:$0xff]
  %v317 = vmul.f32 %v133, %v316
  %v318 = vadd.f32 %v314, %v317
  %s319 = scalar_lea.vmem %s0, 608
  %v320 = vld [vmem:[%s319] sm:$0xff]
  %v321 = vmul.f32 %v152, %v320
  %v322 = vadd.f32 %v318, %v321
  %s323 = scalar_lea.vmem %s0, 616
  %v324 = vld [vmem:[%s323] sm:$0xff]
  %v325 = vmul.f32 %v171, %v324
  %v326 = vadd.f32 %v322, %v325
  %s327 = scalar_lea.vmem %s0, 624
  %v328 = vld [vmem:[%s327] sm:$0xff]
  %v329 = vmul.f32 %v190, %v328
  %v330 = vadd.f32 %v326, %v329
  %s331 = scalar_lea.vmem %s0, 632
  %v332 = vld [vmem:[%s331] sm:$0xff]
  %v333 = vmul.f32 %v209, %v332
  %v334 = vadd.f32 %v330, %v333
  %s335 = scalar_lea.vmem %s0, 1216
  %v336 = vld [vmem:[%s335] sm:$0xff]
  %v337 = vadd.f32 %v334, %v336
  %v338 = vmax.f32 %v337, 0.0
  %s339 = scalar_lea.vmem %s0, 640
  %v340 = vld [vmem:[%s339] sm:$0xff]
  %v341 = vmul.f32 %v38, %v340
  %s342 = scalar_lea.vmem %s0, 648
  %v343 = vld [vmem:[%s342] sm:$0xff]
  %v344 = vmul.f32 %v57, %v343
  %v345 = vadd.f32 %v341, %v344
  %s346 = scalar_lea.vmem %s0, 656
  %v347 = vld [vmem:[%s346] sm:$0xff]
  %v348 = vmul.f32 %v76, %v347
  %v349 = vadd.f32 %v345, %v348
  %s350 = scalar_lea.vmem %s0, 664
  %v351 = vld [vmem:[%s350] sm:$0xff]
  %v352 = vmul.f32 %v95, %v351
  %v353 = vadd.f32 %v349, %v352
  %s354 = scalar_lea.vmem %s0, 672
  %v355 = vld [vmem:[%s354] sm:$0xff]
  %v356 = vmul.f32 %v114, %v355
  %v357 = vadd.f32 %v353, %v356
  %s358 = scalar_lea.vmem %s0, 680
  %v359 = vld [vmem:[%s358] sm:$0xff]
  %v360 = vmul.f32 %v133, %v359
  %v361 = vadd.f32 %v357, %v360
  %s362 = scalar_lea.vmem %s0, 688
  %v363 = vld [vmem:[%s362] sm:$0xff]
  %v364 = vmul.f32 %v152, %v363
  %v365 = vadd.f32 %v361, %v364
  %s366 = scalar_lea.vmem %s0, 696
  %v367 = vld [vmem:[%s366] sm:$0xff]
  %v368 = vmul.f32 %v171, %v367
  %v369 = vadd.f32 %v365, %v368
  %s370 = scalar_lea.vmem %s0, 704
  %v371 = vld [vmem:[%s370] sm:$0xff]
  %v372 = vmul.f32 %v190, %v371
  %v373 = vadd.f32 %v369, %v372
  %s374 = scalar_lea.vmem %s0, 712
  %v375 = vld [vmem:[%s374] sm:$0xff]
  %v376 = vmul.f32 %v209, %v375
  %v377 = vadd.f32 %v373, %v376
  %s378 = scalar_lea.vmem %s0, 1224
  %v379 = vld [vmem:[%s378] sm:$0xff]
  %v380 = vadd.f32 %v377, %v379
  %v381 = vmax.f32 %v380, 0.0
  %s382 = scalar_lea.vmem %s0, 720
  %v383 = vld [vmem:[%s382] sm:$0xff]
  %v384 = vmul.f32 %v38, %v383
  %s385 = scalar_lea.vmem %s0, 728
  %v386 = vld [vmem:[%s385] sm:$0xff]
  %v387 = vmul.f32 %v57, %v386
  %v388 = vadd.f32 %v384, %v387
  %s389 = scalar_lea.vmem %s0, 736
  %v390 = vld [vmem:[%s389] sm:$0xff]
  %v391 = vmul.f32 %v76, %v390
  %v392 = vadd.f32 %v388, %v391
  %s393 = scalar_lea.vmem %s0, 744
  %v394 = vld [vmem:[%s393] sm:$0xff]
  %v395 = vmul.f32 %v95, %v394
  %v396 = vadd.f32 %v392, %v395
  %s397 = scalar_lea.vmem %s0, 752
  %v398 = vld [vmem:[%s397] sm:$0xff]
  %v399 = vmul.f32 %v114, %v398
  %v400 = vadd.f32 %v396, %v399
  %s401 = scalar_lea.vmem %s0, 760
  %v402 = vld [vmem:[%s401] sm:$0xff]
  %v403 = vmul.f32 %v133, %v402
  %v404 = vadd.f32 %v400, %v403
  %s405 = scalar_lea.vmem %s0, 768
  %v406 = vld [vmem:[%s405] sm:$0xff]
  %v407 = vmul.f32 %v152, %v406
  %v408 = vadd.f32 %v404, %v407
  %s409 = scalar_lea.vmem %s0, 776
  %v410 = vld [vmem:[%s409] sm:$0xff]
  %v411 = vmul.f32 %v171, %v410
  %v412 = vadd.f32 %v408, %v411
  %s413 = scalar_lea.vmem %s0, 784
  %v414 = vld [vmem:[%s413] sm:$0xff]
  %v415 = vmul.f32 %v190, %v414
  %v416 = vadd.f32 %v412, %v415
  %s417 = scalar_lea.vmem %s0, 792
  %v418 = vld [vmem:[%s417] sm:$0xff]
  %v419 = vmul.f32 %v209, %v418
  %v420 = vadd.f32 %v416, %v419
  %s421 = scalar_lea.vmem %s0, 1232
  %v422 = vld [vmem:[%s421] sm:$0xff]
  %v423 = vadd.f32 %v420, %v422
  %v424 = vmax.f32 %v423, 0.0
  %s425 = scalar_lea.vmem %s0, 800
  %v426 = vld [vmem:[%s425] sm:$0xff]
  %v427 = vmul.f32 %v38, %v426
  %s428 = scalar_lea.vmem %s0, 808
  %v429 = vld [vmem:[%s428] sm:$0xff]
  %v430 = vmul.f32 %v57, %v429
  %v431 = vadd.f32 %v427, %v430
  %s432 = scalar_lea.vmem %s0, 816
  %v433 = vld [vmem:[%s432] sm:$0xff]
  %v434 = vmul.f32 %v76, %v433
  %v435 = vadd.f32 %v431, %v434
  %s436 = scalar_lea.vmem %s0, 824
  %v437 = vld [vmem:[%s436] sm:$0xff]
  %v438 = vmul.f32 %v95, %v437
  %v439 = vadd.f32 %v435, %v438
  %s440 = scalar_lea.vmem %s0, 832
  %v441 = vld [vmem:[%s440] sm:$0xff]
  %v442 = vmul.f32 %v114, %v441
  %v443 = vadd.f32 %v439, %v442
  %s444 = scalar_lea.vmem %s0, 840
  %v445 = vld [vmem:[%s444] sm:$0xff]
  %v446 = vmul.f32 %v133, %v445
  %v447 = vadd.f32 %v443, %v446
  %s448 = scalar_lea.vmem %s0, 848
  %v449 = vld [vmem:[%s448] sm:$0xff]
  %v450 = vmul.f32 %v152, %v449
  %v451 = vadd.f32 %v447, %v450
  %s452 = scalar_lea.vmem %s0, 856
  %v453 = vld [vmem:[%s452] sm:$0xff]
  %v454 = vmul.f32 %v171, %v453
  %v455 = vadd.f32 %v451, %v454
  %s456 = scalar_lea.vmem %s0, 864
  %v457 = vld [vmem:[%s456] sm:$0xff]
  %v458 = vmul.f32 %v190, %v457
  %v459 = vadd.f32 %v455, %v458
  %s460 = scalar_lea.vmem %s0, 872
  %v461 = vld [vmem:[%s460] sm:$0xff]
  %v462 = vmul.f32 %v209, %v461
  %v463 = vadd.f32 %v459, %v462
  %s464 = scalar_lea.vmem %s0, 1240
  %v465 = vld [vmem:[%s464] sm:$0xff]
  %v466 = vadd.f32 %v463, %v465
  %v467 = vmax.f32 %v466, 0.0
  %s468 = scalar_lea.vmem %s0, 880
  %v469 = vld [vmem:[%s468] sm:$0xff]
  %v470 = vmul.f32 %v38, %v469
  %s471 = scalar_lea.vmem %s0, 888
  %v472 = vld [vmem:[%s471] sm:$0xff]
  %v473 = vmul.f32 %v57, %v472
  %v474 = vadd.f32 %v470, %v473
  %s475 = scalar_lea.vmem %s0, 896
  %v476 = vld [vmem:[%s475] sm:$0xff]
  %v477 = vmul.f32 %v76, %v476
  %v478 = vadd.f32 %v474, %v477
  %s479 = scalar_lea.vmem %s0, 904
  %v480 = vld [vmem:[%s479] sm:$0xff]
  %v481 = vmul.f32 %v95, %v480
  %v482 = vadd.f32 %v478, %v481
  %s483 = scalar_lea.vmem %s0, 912
  %v484 = vld [vmem:[%s483] sm:$0xff]
  %v485 = vmul.f32 %v114, %v484
  %v486 = vadd.f32 %v482, %v485
  %s487 = scalar_lea.vmem %s0, 920
  %v488 = vld [vmem:[%s487] sm:$0xff]
  %v489 = vmul.f32 %v133, %v488
  %v490 = vadd.f32 %v486, %v489
  %s491 = scalar_lea.vmem %s0, 928
  %v492 = vld [vmem:[%s491] sm:$0xff]
  %v493 = vmul.f32 %v152, %v492
  %v494 = vadd.f32 %v490, %v493
  %s495 = scalar_lea.vmem %s0, 936
  %v496 = vld [vmem:[%s495] sm:$0xff]
  %v497 = vmul.f32 %v171, %v496
  %v498 = vadd.f32 %v494, %v497
  %s499 = scalar_lea.vmem %s0, 944
  %v500 = vld [vmem:[%s499] sm:$0xff]
  %v501 = vmul.f32 %v190, %v500
  %v502 = vadd.f32 %v498, %v501
  %s503 = scalar_lea.vmem %s0, 952
  %v504 = vld [vmem:[%s503] sm:$0xff]
  %v505 = vmul.f32 %v209, %v504
  %v506 = vadd.f32 %v502, %v505
  %s507 = scalar_lea.vmem %s0, 1248
  %v508 = vld [vmem:[%s507] sm:$0xff]
  %v509 = vadd.f32 %v506, %v508
  %v510 = vmax.f32 %v509, 0.0
  %s511 = scalar_lea.vmem %s0, 960
  %v512 = vld [vmem:[%s511] sm:$0xff]
  %v513 = vmul.f32 %v38, %v512
  %s514 = scalar_lea.vmem %s0, 968
  %v515 = vld [vmem:[%s514] sm:$0xff]
  %v516 = vmul.f32 %v57, %v515
  %v517 = vadd.f32 %v513, %v516
  %s518 = scalar_lea.vmem %s0, 976
  %v519 = vld [vmem:[%s518] sm:$0xff]
  %v520 = vmul.f32 %v76, %v519
  %v521 = vadd.f32 %v517, %v520
  %s522 = scalar_lea.vmem %s0, 984
  %v523 = vld [vmem:[%s522] sm:$0xff]
  %v524 = vmul.f32 %v95, %v523
  %v525 = vadd.f32 %v521, %v524
  %s526 = scalar_lea.vmem %s0, 992
  %v527 = vld [vmem:[%s526] sm:$0xff]
  %v528 = vmul.f32 %v114, %v527
  %v529 = vadd.f32 %v525, %v528
  %s530 = scalar_lea.vmem %s0, 1000
  %v531 = vld [vmem:[%s530] sm:$0xff]
  %v532 = vmul.f32 %v133, %v531
  %v533 = vadd.f32 %v529, %v532
  %s534 = scalar_lea.vmem %s0, 1008
  %v535 = vld [vmem:[%s534] sm:$0xff]
  %v536 = vmul.f32 %v152, %v535
  %v537 = vadd.f32 %v533, %v536
  %s538 = scalar_lea.vmem %s0, 1016
  %v539 = vld [vmem:[%s538] sm:$0xff]
  %v540 = vmul.f32 %v171, %v539
  %v541 = vadd.f32 %v537, %v540
  %s542 = scalar_lea.vmem %s0, 1024
  %v543 = vld [vmem:[%s542] sm:$0xff]
  %v544 = vmul.f32 %v190, %v543
  %v545 = vadd.f32 %v541, %v544
  %s546 = scalar_lea.vmem %s0, 1032
  %v547 = vld [vmem:[%s546] sm:$0xff]
  %v548 = vmul.f32 %v209, %v547
  %v549 = vadd.f32 %v545, %v548
  %s550 = scalar_lea.vmem %s0, 1256
  %v551 = vld [vmem:[%s550] sm:$0xff]
  %v552 = vadd.f32 %v549, %v551
  %v553 = vmax.f32 %v552, 0.0
  %s554 = scalar_lea.vmem %s0, 1040
  %v555 = vld [vmem:[%s554] sm:$0xff]
  %v556 = vmul.f32 %v38, %v555
  %s557 = scalar_lea.vmem %s0, 1048
  %v558 = vld [vmem:[%s557] sm:$0xff]
  %v559 = vmul.f32 %v57, %v558
  %v560 = vadd.f32 %v556, %v559
  %s561 = scalar_lea.vmem %s0, 1056
  %v562 = vld [vmem:[%s561] sm:$0xff]
  %v563 = vmul.f32 %v76, %v562
  %v564 = vadd.f32 %v560, %v563
  %s565 = scalar_lea.vmem %s0, 1064
  %v566 = vld [vmem:[%s565] sm:$0xff]
  %v567 = vmul.f32 %v95, %v566
  %v568 = vadd.f32 %v564, %v567
  %s569 = scalar_lea.vmem %s0, 1072
  %v570 = vld [vmem:[%s569] sm:$0xff]
  %v571 = vmul.f32 %v114, %v570
  %v572 = vadd.f32 %v568, %v571
  %s573 = scalar_lea.vmem %s0, 1080
  %v574 = vld [vmem:[%s573] sm:$0xff]
  %v575 = vmul.f32 %v133, %v574
  %v576 = vadd.f32 %v572, %v575
  %s577 = scalar_lea.vmem %s0, 1088
  %v578 = vld [vmem:[%s577] sm:$0xff]
  %v579 = vmul.f32 %v152, %v578
  %v580 = vadd.f32 %v576, %v579
  %s581 = scalar_lea.vmem %s0, 1096
  %v582 = vld [vmem:[%s581] sm:$0xff]
  %v583 = vmul.f32 %v171, %v582
  %v584 = vadd.f32 %v580, %v583
  %s585 = scalar_lea.vmem %s0, 1104
  %v586 = vld [vmem:[%s585] sm:$0xff]
  %v587 = vmul.f32 %v190, %v586
  %v588 = vadd.f32 %v584, %v587
  %s589 = scalar_lea.vmem %s0, 1112
  %v590 = vld [vmem:[%s589] sm:$0xff]
  %v591 = vmul.f32 %v209, %v590
  %v592 = vadd.f32 %v588, %v591
  %s593 = scalar_lea.vmem %s0, 1264
  %v594 = vld [vmem:[%s593] sm:$0xff]
  %v595 = vadd.f32 %v592, %v594
  %v596 = vmax.f32 %v595, 0.0
  %s597 = scalar_lea.vmem %s0, 1120
  %v598 = vld [vmem:[%s597] sm:$0xff]
  %v599 = vmul.f32 %v38, %v598
  %s600 = scalar_lea.vmem %s0, 1128
  %v601 = vld [vmem:[%s600] sm:$0xff]
  %v602 = vmul.f32 %v57, %v601
  %v603 = vadd.f32 %v599, %v602
  %s604 = scalar_lea.vmem %s0, 1136
  %v605 = vld [vmem:[%s604] sm:$0xff]
  %v606 = vmul.f32 %v76, %v605
  %v607 = vadd.f32 %v603, %v606
  %s608 = scalar_lea.vmem %s0, 1144
  %v609 = vld [vmem:[%s608] sm:$0xff]
  %v610 = vmul.f32 %v95, %v609
  %v611 = vadd.f32 %v607, %v610
  %s612 = scalar_lea.vmem %s0, 1152
  %v613 = vld [vmem:[%s612] sm:$0xff]
  %v614 = vmul.f32 %v114, %v613
  %v615 = vadd.f32 %v611, %v614
  %s616 = scalar_lea.vmem %s0, 1160
  %v617 = vld [vmem:[%s616] sm:$0xff]
  %v618 = vmul.f32 %v133, %v617
  %v619 = vadd.f32 %v615, %v618
  %s620 = scalar_lea.vmem %s0, 1168
  %v621 = vld [vmem:[%s620] sm:$0xff]
  %v622 = vmul.f32 %v152, %v621
  %v623 = vadd.f32 %v619, %v622
  %s624 = scalar_lea.vmem %s0, 1176
  %v625 = vld [vmem:[%s624] sm:$0xff]
  %v626 = vmul.f32 %v171, %v625
  %v627 = vadd.f32 %v623, %v626
  %s628 = scalar_lea.vmem %s0, 1184
  %v629 = vld [vmem:[%s628] sm:$0xff]
  %v630 = vmul.f32 %v190, %v629
  %v631 = vadd.f32 %v627, %v630
  %s632 = scalar_lea.vmem %s0, 1192
  %v633 = vld [vmem:[%s632] sm:$0xff]
  %v634 = vmul.f32 %v209, %v633
  %v635 = vadd.f32 %v631, %v634
  %s636 = scalar_lea.vmem %s0, 1272
  %v637 = vld [vmem:[%s636] sm:$0xff]
  %v638 = vadd.f32 %v635, %v637
  %v639 = vmax.f32 %v638, 0.0
  %s640 = scalar_lea.vmem %s0, 1280
  %v641 = vld [vmem:[%s640] sm:$0xff]
  %v642 = vmul.f32 %v252, %v641
  %s643 = scalar_lea.vmem %s0, 1288
  %v644 = vld [vmem:[%s643] sm:$0xff]
  %v645 = vmul.f32 %v295, %v644
  %v646 = vadd.f32 %v642, %v645
  %s647 = scalar_lea.vmem %s0, 1296
  %v648 = vld [vmem:[%s647] sm:$0xff]
  %v649 = vmul.f32 %v338, %v648
  %v650 = vadd.f32 %v646, %v649
  %s651 = scalar_lea.vmem %s0, 1304
  %v652 = vld [vmem:[%s651] sm:$0xff]
  %v653 = vmul.f32 %v381, %v652
  %v654 = vadd.f32 %v650, %v653
  %s655 = scalar_lea.vmem %s0, 1312
  %v656 = vld [vmem:[%s655] sm:$0xff]
  %v657 = vmul.f32 %v424, %v656
  %v658 = vadd.f32 %v654, %v657
  %s659 = scalar_lea.vmem %s0, 1320
  %v660 = vld [vmem:[%s659] sm:$0xff]
  %v661 = vmul.f32 %v467, %v660
  %v662 = vadd.f32 %v658, %v661
  %s663 = scalar_lea.vmem %s0, 1328
  %v664 = vld [vmem:[%s663] sm:$0xff]
  %v665 = vmul.f32 %v510, %v664
  %v666 = vadd.f32 %v662, %v665
  %s667 = scalar_lea.vmem %s0, 1336
  %v668 = vld [vmem:[%s667] sm:$0xff]
  %v669 = vmul.f32 %v553, %v668
  %v670 = vadd.f32 %v666, %v669
  %s671 = scalar_lea.vmem %s0, 1344
  %v672 = vld [vmem:[%s671] sm:$0xff]
  %v673 = vmul.f32 %v596, %v672
  %v674 = vadd.f32 %v670, %v673
  %s675 = scalar_lea.vmem %s0, 1352
  %v676 = vld [vmem:[%s675] sm:$0xff]
  %v677 = vmul.f32 %v639, %v676
  %v678 = vadd.f32 %v674, %v677
  %s679 = scalar_lea.vmem %s0, 1520
  %v680 = vld [vmem:[%s679] sm:$0xff]
  %v681 = vadd.f32 %v678, %v680
  %s682 = scalar_lea.vmem %s0, 1360
  %v683 = vld [vmem:[%s682] sm:$0xff]
  %v684 = vmul.f32 %v252, %v683
  %s685 = scalar_lea.vmem %s0, 1368
  %v686 = vld [vmem:[%s685] sm:$0xff]
  %v687 = vmul.f32 %v295, %v686
  %v688 = vadd.f32 %v684, %v687
  %s689 = scalar_lea.vmem %s0, 1376
  %v690 = vld [vmem:[%s689] sm:$0xff]
  %v691 = vmul.f32 %v338, %v690
  %v692 = vadd.f32 %v688, %v691
  %s693 = scalar_lea.vmem %s0, 1384
  %v694 = vld [vmem:[%s693] sm:$0xff]
  %v695 = vmul.f32 %v381, %v694
  %v696 = vadd.f32 %v692, %v695
  %s697 = scalar_lea.vmem %s0, 1392
  %v698 = vld [vmem:[%s697] sm:$0xff]
  %v699 = vmul.f32 %v424, %v698
  %v700 = vadd.f32 %v696, %v699
  %s701 = scalar_lea.vmem %s0, 1400
  %v702 = vld [vmem:[%s701] sm:$0xff]
  %v703 = vmul.f32 %v467, %v702
  %v704 = vadd.f32 %v700, %v703
  %s705 = scalar_lea.vmem %s0, 1408
  %v706 = vld [vmem:[%s705] sm:$0xff]
  %v707 = vmul.f32 %v510, %v706
  %v708 = vadd.f32 %v704, %v707
  %s709 = scalar_lea.vmem %s0, 1416
  %v710 = vld [vmem:[%s709] sm:$0xff]
  %v711 = vmul.f32 %v553, %v710
  %v712 = vadd.f32 %v708, %v711
  %s713 = scalar_lea.vmem %s0, 1424
  %v714 = vld [vmem:[%s713] sm:$0xff]
  %v715 = vmul.f32 %v596, %v714
  %v716 = vadd.f32 %v712, %v715
  %s717 = scalar_lea.vmem %s0, 1432
  %v718 = vld [vmem:[%s717] sm:$0xff]
  %v719 = vmul.f32 %v639, %v718
  %v720 = vadd.f32 %v716, %v719
  %s721 = scalar_lea.vmem %s0, 1528
  %v722 = vld [vmem:[%s721] sm:$0xff]
  %v723 = vadd.f32 %v720, %v722
  %s724 = scalar_lea.vmem %s0, 1440
  %v725 = vld [vmem:[%s724] sm:$0xff]
  %v726 = vmul.f32 %v252, %v725
  %s727 = scalar_lea.vmem %s0, 1448
  %v728 = vld [vmem:[%s727] sm:$0xff]
  %v729 = vmul.f32 %v295, %v728
  %v730 = vadd.f32 %v726, %v729
  %s731 = scalar_lea.vmem %s0, 1456
  %v732 = vld [vmem:[%s731] sm:$0xff]
  %v733 = vmul.f32 %v338, %v732
  %v734 = vadd.f32 %v730, %v733
  %s735 = scalar_lea.vmem %s0, 1464
  %v736 = vld [vmem:[%s735] sm:$0xff]
  %v737 = vmul.f32 %v381, %v736
  %v738 = vadd.f32 %v734, %v737
  %s739 = scalar_lea.vmem %s0, 1472
  %v740 = vld [vmem:[%s739] sm:$0xff]
  %v741 = vmul.f32 %v424, %v740
  %v742 = vadd.f32 %v738, %v741
  %s743 = scalar_lea.vmem %s0, 1480
  %v744 = vld [vmem:[%s743] sm:$0xff]
  %v745 = vmul.f32 %v467, %v744
  %v746 = vadd.f32 %v742, %v745
  %s747 = scalar_lea.vmem %s0, 1488
  %v748 = vld [vmem:[%s747] sm:$0xff]
  %v749 = vmul.f32 %v510, %v748
  %v750 = vadd.f32 %v746, %v749
  %s751 = scalar_lea.vmem %s0, 1496
  %v752 = vld [vmem:[%s751] sm:$0xff]
  %v753 = vmul.f32 %v553, %v752
  %v754 = vadd.f32 %v750, %v753
  %s755 = scalar_lea.vmem %s0, 1504
  %v756 = vld [vmem:[%s755] sm:$0xff]
  %v757 = vmul.f32 %v596, %v756
  %v758 = vadd.f32 %v754, %v757
  %s759 = scalar_lea.vmem %s0, 1512
  %v760 = vld [vmem:[%s759] sm:$0xff]
  %v761 = vmul.f32 %v639, %v760
  %v762 = vadd.f32 %v758, %v761
  %s763 = scalar_lea.vmem %s0, 1536
  %v764 = vld [vmem:[%s763] sm:$0xff]
  %v765 = vadd.f32 %v762, %v764
  %v766 = vmax.f32 %v723, %v765
  %v767 = vmax.f32 %v681, %v766
  %v768 = vsub.f32 %v681, %v767
  %v769 = vmul.f32 %v768, 1.442695
  %v770 = vpow.pop %v769
  %v771 = vsub.f32 %v723, %v767
  %v772 = vmul.f32 %v771, 1.442695
  %v773 = vpow.pop %v772
  %v774 = vsub.f32 %v765, %v767
  %v775 = vmul.f32 %v774, 1.442695
  %v776 = vpow.pop %v775
  %v777 = vadd.f32 %v770, %v773
  %v778 = vadd.f32 %v777, %v776
  %v779 = vlog2.pop %v778
  %v780 = vmul.f32 %v779, 0.6931472
  %v781 = vadd.f32 %v767, %v780
  %v782 = vsub.f32 %v681, %v781
  %783 = vst [vmem:[%s2] sm:$0xff] %v782
  %v784 = vsub.f32 %v723, %v781
  %s785 = scalar_lea.vmem %s2, %s12
  %786 = vst [vmem:[%s785] sm:$0xff] %v784
  %v787 = vsub.f32 %v765, %v781
  %s788 = scalar_lea.vmem %s2, %s15
  %789 = vst [vmem:[%s788] sm:$0xff] %v787
  // Predicated region
  $region10: #{net_forward.1} parent=0 // pred_check
    _
  $region11: #{net_forward.1} parent=0 // pred_check_branch
    %791 = sbr.rel (0) target = $region13
  $region12: #{net_forward.1} parent=0 // pred_region
    _
  $region13: #{net_forward.1} parent=0 // pred_fallthru
    _
  // Predicated region
  $region14: #{net_forward.1} parent=0 // pred_check
    _
  $region15: #{net_forward.1} parent=0 // pred_check_branch
    %793 = sbr.rel (0) target = $region17
  $region16: #{net_forward.1} parent=0 // pred_region
    _
  $region17: #{net_forward.1} parent=0 // pred_fallthru
    _

</llo_original>
